<compile_context>
chip_gen: v6e
topology: v6e:2x2x1
jax: 0.10.0
libtpu: 0.0.40
codegen_flags: <defaults>
</compile_context>

<pallas_src>
import jax
import jax.numpy as jnp
from jax.experimental import pallas as pl
from jax.experimental.pallas import tpu as pltpu

LANES = 128  # padded channel width for lane-dense intermediates


def _make_kernel(TR, H, W, Cin, n_rt):
    """Build the CentroidNet kernel for static tile sizes."""
    M_tile = TR * W
    K = 9 * Cin
    inv_hw = 1.0 / float(H * W)

    def kernel(x_ref, wconv_ref, bconv_ref, wfc_ref, bfc_ref,
               w1_ref, b1_ref, w2_ref, b2_ref, out_ref, acc_ref):
        # x_ref: (Hp, Wp, Cin) padded image for this batch element
        rt = pl.program_id(1)
        row0 = pl.multiple_of(rt * TR, TR)
        rows = x_ref[pl.ds(row0, TR + 2), :, :]            # (TR+2, Wp, Cin)

        # --- im2col: 9 shifted taps concatenated along the channel axis ---
        taps = [rows[kh:kh + TR, kw:kw + W, :]
                for kh in range(3) for kw in range(3)]     # 9 x (TR, W, Cin)
        patch = jnp.concatenate(taps, axis=-1).reshape(M_tile, K)

        # --- single fused conv matmul (K = 9*Cin), lane-dense (·,128) out ---
        feat = jnp.dot(patch, wconv_ref[...],
                       preferred_element_type=jnp.float32)  # (M_tile, 128)
        feat = jnp.maximum(feat + bconv_ref[...], 0.0)       # conv ReLU

        # --- partial global-average-pool sum via MXU ones-matmul ---
        # (8 identical result rows; MXU sublane granularity is 8 so the
        #  redundancy is free and keeps VPU/XLU slots open)
        ones = jnp.ones((8, M_tile), jnp.float32)
        partial = jnp.dot(ones, feat, preferred_element_type=jnp.float32)

        @pl.when(rt == 0)
        def _init():
            acc_ref[...] = jnp.zeros_like(acc_ref)

        acc_ref[...] = acc_ref[...] + partial

        # --- epilogue: finish GAP + fc head on the last row tile ---
        @pl.when(rt == n_rt - 1)
        def _epilogue():
            # All 8 rows of acc are identical -> run the tiny head on the full
            # (8, 128) slab and store the whole output tile unmasked.
            pooled = acc_ref[...] * inv_hw                   # (8, 128)
            h = jnp.dot(pooled, wfc_ref[...],
                        preferred_element_type=jnp.float32)
            h = jnp.maximum(h + bfc_ref[...], 0.0)           # relu(extractor)
            h = jnp.dot(h, w1_ref[...],
                        preferred_element_type=jnp.float32)
            h = jnp.maximum(h + b1_ref[...], 0.0)            # relu(fc_1)
            o = jnp.dot(h, w2_ref[...],
                        preferred_element_type=jnp.float32)
            o = o + b2_ref[...]                              # fc_2 (cols 0:2)
            out_ref[...] = o.reshape(1, 8, LANES)

    return kernel


def _pad_params(params, cin):
    """Zero-pad weights so every intermediate is 128-lane dense (math unchanged)."""
    (wconv, bconv, wfc, bfc, w1, b1, w2, b2) = params
    K = 9 * cin
    Cf = wconv.shape[-1]
    f32 = jnp.float32
    wconv_p = jnp.zeros((K, LANES), f32).at[:, :Cf].set(wconv.reshape(K, Cf))
    bconv_p = jnp.zeros((1, LANES), f32).at[:, :Cf].set(bconv)
    wfc_p = jnp.zeros((LANES, LANES), f32).at[:Cf, :64].set(wfc)
    bfc_p = jnp.zeros((1, LANES), f32).at[:, :64].set(bfc)
    w1_p = jnp.zeros((LANES, LANES), f32).at[:64, :8].set(w1)
    b1_p = jnp.zeros((1, LANES), f32).at[:, :8].set(b1)
    w2_p = jnp.zeros((LANES, LANES), f32).at[:8, :2].set(w2)
    b2_p = jnp.zeros((1, LANES), f32).at[:, :2].set(b2)
    return (wconv_p, bconv_p, wfc_p, bfc_p, w1_p, b1_p, w2_p, b2_p)


def _pick_row_tile(H, W, requested=None, max_rows=1024):
    """Largest divisor of H whose tile keeps the (TR*W, 128) slab small."""
    if requested is not None and H % requested == 0:
        return requested
    divs = [d for d in range(1, H + 1) if H % d == 0]
    ok = [d for d in divs if d * W <= max_rows]
    return max(ok) if ok else 1


def centroidnet_forward(x_nchw, params, *, row_tile=None):
    """x_nchw: (B, Cin, H, W) float32. Returns (B, 2) float32."""
    B, Cin, H, W = x_nchw.shape
    TR = _pick_row_tile(H, W, row_tile)
    n_rt = H // TR
    Hp, Wp = H + 2, W + 2

    # NCHW -> NHWC + zero pad (see TODO at top of file).
    x_nhwc = jnp.transpose(x_nchw, (0, 2, 3, 1))
    x_pad = jnp.pad(x_nhwc, ((0, 0), (1, 1), (1, 1), (0, 0)))

    padded = _pad_params(params, Cin)
    kernel = _make_kernel(TR, H, W, Cin, n_rt)

    def weight_spec(shape):
        return pl.BlockSpec(shape, lambda b, r: (0,) * len(shape))

    in_specs = [
        pl.BlockSpec((pl.Squeezed(), Hp, Wp, Cin), lambda b, r: (b, 0, 0, 0)),
        weight_spec((9 * Cin, LANES)),   # wconv (padded)
        weight_spec((1, LANES)),         # bconv
        weight_spec((LANES, LANES)),     # wfc
        weight_spec((1, LANES)),         # bfc
        weight_spec((LANES, LANES)),     # w1
        weight_spec((1, LANES)),         # b1
        weight_spec((LANES, LANES)),     # w2
        weight_spec((1, LANES)),         # b2
    ]
    out_specs = pl.BlockSpec((1, 8, LANES), lambda b, r: (b, 0, 0))

    flops = (2 * B * H * W * (9 * Cin) * LANES        # fused conv matmul
             + 2 * B * n_rt * 8 * (TR * W) * LANES    # pooling ones-matmul
             + 2 * B * 3 * 8 * LANES * LANES)         # fc head (on 8-row slab)
    bytes_accessed = (x_pad.size + sum(p.size for p in padded)
                      + B * 8 * LANES) * 4

    out_full = pl.pallas_call(
        kernel,
        out_shape=jax.ShapeDtypeStruct((B, 8, LANES), jnp.float32),
        grid_spec=pltpu.PrefetchScalarGridSpec(
            num_scalar_prefetch=0,
            grid=(B, n_rt),
            in_specs=in_specs,
            out_specs=out_specs,
            scratch_shapes=[pltpu.VMEM((8, LANES), jnp.float32)],
        ),
        compiler_params=pltpu.CompilerParams(
            dimension_semantics=("parallel", "arbitrary"),
            vmem_limit_bytes=32 * 1024 * 1024,
        ),
        cost_estimate=pl.CostEstimate(
            flops=flops, transcendentals=0, bytes_accessed=bytes_accessed),
    )(x_pad, *padded)

    return out_full[:, 0, :2]


def init_params(key, cin=4, num_ftrs=32):
    ks = jax.random.split(key, 8)
    wconv = jax.random.normal(ks[0], (9, cin, num_ftrs), jnp.float32) * 0.1
    bconv = jax.random.normal(ks[1], (1, num_ftrs), jnp.float32) * 0.01
    wfc = jax.random.normal(ks[2], (num_ftrs, 64), jnp.float32) * 0.1
    bfc = jax.random.normal(ks[3], (1, 64), jnp.float32) * 0.01
    w1 = jax.random.normal(ks[4], (64, 8), jnp.float32) * 0.1
    b1 = jax.random.normal(ks[5], (1, 8), jnp.float32) * 0.01
    w2 = jax.random.normal(ks[6], (8, 2), jnp.float32) * 0.1
    b2 = jax.random.normal(ks[7], (1, 2), jnp.float32) * 0.01
    return (wconv, bconv, wfc, bfc, w1, b1, w2, b2)


def reference_forward(x_nchw, params):
    """Pure-JAX reference with identical math (for a sanity check)."""
    (wconv, bconv, wfc, bfc, w1, b1, w2, b2) = params
    B, Cin, H, W = x_nchw.shape
    x = jnp.transpose(x_nchw, (0, 2, 3, 1))
    xp = jnp.pad(x, ((0, 0), (1, 1), (1, 1), (0, 0)))
    Cf = wconv.shape[-1]
    acc = jnp.zeros((B * H * W, Cf), jnp.float32)
    for t in range(9):
        kh, kw = t // 3, t % 3
        patch = xp[:, kh:kh + H, kw:kw + W, :].reshape(B * H * W, Cin)
        acc = acc + patch @ wconv[t]
    feat = jnp.maximum(acc + bconv, 0.0)
    pooled = jnp.mean(feat.reshape(B, H * W, Cf), axis=1)
    h = jnp.maximum(pooled @ wfc + bfc, 0.0)
    h = jnp.maximum(h @ w1 + b1, 0.0)
    return h @ w2 + b2


if __name__ == "__main__":
    key = jax.random.PRNGKey(0)
    k_x, k_p = jax.random.split(key)

    B, Cin, H, W = 2, 4, 16, 16
    x = jax.random.normal(k_x, (B, Cin, H, W), jnp.float32)
    params = init_params(k_p, cin=Cin, num_ftrs=32)

    out = jax.block_until_ready(centroidnet_forward(x, params))
    ref = reference_forward(x, params)

    assert out.shape == (B, 2)
    assert jnp.allclose(out, ref, atol=1e-3, rtol=1e-3), "mismatch vs reference"

    print("KERNEL_OK")
</pallas_src>

<mosaic_0001>
module attributes {stable_mosaic.version = 11 : i64} {
  func.func @kernel(%arg0: i32, %arg1: i32, %arg2: memref<1x18x18x4xf32, #tpu.memory_space<vmem>>, %arg3: memref<36x128xf32, #tpu.memory_space<vmem>>, %arg4: memref<1x128xf32, #tpu.memory_space<vmem>>, %arg5: memref<128x128xf32, #tpu.memory_space<vmem>>, %arg6: memref<1x128xf32, #tpu.memory_space<vmem>>, %arg7: memref<128x128xf32, #tpu.memory_space<vmem>>, %arg8: memref<1x128xf32, #tpu.memory_space<vmem>>, %arg9: memref<128x128xf32, #tpu.memory_space<vmem>>, %arg10: memref<1x128xf32, #tpu.memory_space<vmem>>, %arg11: memref<1x8x128xf32, #tpu.memory_space<vmem>>, %arg12: memref<8x128xf32, #tpu.memory_space<vmem>>) attributes {dimension_semantics = [#tpu.dimension_semantics<parallel>, #tpu.dimension_semantics<arbitrary>], iteration_bounds = array<i64: 2, 1>, scalar_prefetch = 0 : i64, scratch_operands = 1 : i64, tpu.core_type = #tpu.core_type<tc>, window_params = [{transform_indices = @transform_0, window_bounds = array<i64: 1, 18, 18, 4>}, {pipeline_mode = #tpu.pipeline_mode<synchronous>, transform_indices = @transform_1, window_bounds = array<i64: 36, 128>}, {pipeline_mode = #tpu.pipeline_mode<synchronous>, transform_indices = @transform_2, window_bounds = array<i64: 1, 128>}, {pipeline_mode = #tpu.pipeline_mode<synchronous>, transform_indices = @transform_3, window_bounds = array<i64: 128, 128>}, {pipeline_mode = #tpu.pipeline_mode<synchronous>, transform_indices = @transform_4, window_bounds = array<i64: 1, 128>}, {pipeline_mode = #tpu.pipeline_mode<synchronous>, transform_indices = @transform_5, window_bounds = array<i64: 128, 128>}, {pipeline_mode = #tpu.pipeline_mode<synchronous>, transform_indices = @transform_6, window_bounds = array<i64: 1, 128>}, {pipeline_mode = #tpu.pipeline_mode<synchronous>, transform_indices = @transform_7, window_bounds = array<i64: 128, 128>}, {pipeline_mode = #tpu.pipeline_mode<synchronous>, transform_indices = @transform_8, window_bounds = array<i64: 1, 128>}, {transform_indices = @transform_9, window_bounds = array<i64: 1, 8, 128>}]} {
    %c16_i32 = arith.constant 16 : i32
    %0 = arith.muli %arg1, %c16_i32 : i32
    %1 = tpu.assume_multiple %0, 16 : i32
    %c0 = arith.constant 0 : index
    %2 = arith.index_cast %1 : i32 to index
    %c0_0 = arith.constant 0 : index
    %c0_1 = arith.constant 0 : index
    %3 = vector.load %arg2[%c0, %2, %c0_0, %c0_1] : memref<1x18x18x4xf32, #tpu.memory_space<vmem>>, vector<1x18x18x4xf32>
    %4 = vector.shape_cast %3 : vector<1x18x18x4xf32> to vector<18x18x4xf32>
    %5 = vector.extract_strided_slice %4 {offsets = [0, 0, 0], sizes = [16, 16, 4], strides = [1, 1, 1]} : vector<18x18x4xf32> to vector<16x16x4xf32>
    %6 = vector.extract_strided_slice %4 {offsets = [0, 1, 0], sizes = [16, 16, 4], strides = [1, 1, 1]} : vector<18x18x4xf32> to vector<16x16x4xf32>
    %7 = vector.extract_strided_slice %4 {offsets = [0, 2, 0], sizes = [16, 16, 4], strides = [1, 1, 1]} : vector<18x18x4xf32> to vector<16x16x4xf32>
    %8 = vector.extract_strided_slice %4 {offsets = [1, 0, 0], sizes = [16, 16, 4], strides = [1, 1, 1]} : vector<18x18x4xf32> to vector<16x16x4xf32>
    %9 = vector.extract_strided_slice %4 {offsets = [1, 1, 0], sizes = [16, 16, 4], strides = [1, 1, 1]} : vector<18x18x4xf32> to vector<16x16x4xf32>
    %10 = vector.extract_strided_slice %4 {offsets = [1, 2, 0], sizes = [16, 16, 4], strides = [1, 1, 1]} : vector<18x18x4xf32> to vector<16x16x4xf32>
    %11 = vector.extract_strided_slice %4 {offsets = [2, 0, 0], sizes = [16, 16, 4], strides = [1, 1, 1]} : vector<18x18x4xf32> to vector<16x16x4xf32>
    %12 = vector.extract_strided_slice %4 {offsets = [2, 1, 0], sizes = [16, 16, 4], strides = [1, 1, 1]} : vector<18x18x4xf32> to vector<16x16x4xf32>
    %13 = vector.extract_strided_slice %4 {offsets = [2, 2, 0], sizes = [16, 16, 4], strides = [1, 1, 1]} : vector<18x18x4xf32> to vector<16x16x4xf32>
    %14 = tpu.concatenate %5, %6, %7, %8, %9, %10, %11, %12, %13 in 2 : vector<16x16x4xf32>, vector<16x16x4xf32>, vector<16x16x4xf32>, vector<16x16x4xf32>, vector<16x16x4xf32>, vector<16x16x4xf32>, vector<16x16x4xf32>, vector<16x16x4xf32>, vector<16x16x4xf32> -> vector<16x16x36xf32>
    %15 = vector.shape_cast %14 : vector<16x16x36xf32> to vector<256x36xf32>
    %c0_2 = arith.constant 0 : index
    %c0_3 = arith.constant 0 : index
    %16 = vector.load %arg3[%c0_2, %c0_3] : memref<36x128xf32, #tpu.memory_space<vmem>>, vector<36x128xf32>
    %cst = arith.constant dense<0.000000e+00> : vector<256x128xf32>
    %17 = tpu.matmul %15, %16, %cst {dimension_numbers = #tpu.dot_dimension_numbers<[1], [0], [0], [1], [0, 0, 1, 1], [], []>} : vector<256x36xf32>, vector<36x128xf32>, vector<256x128xf32> -> vector<256x128xf32>
    %c0_4 = arith.constant 0 : index
    %c0_5 = arith.constant 0 : index
    %18 = vector.load %arg4[%c0_4, %c0_5] : memref<1x128xf32, #tpu.memory_space<vmem>>, vector<1x128xf32>
    %19 = vector.broadcast %18 : vector<1x128xf32> to vector<256x128xf32>
    %20 = arith.addf %17, %19 : vector<256x128xf32>
    %cst_6 = arith.constant 0.000000e+00 : f32
    %21 = vector.broadcast %cst_6 : f32 to vector<256x128xf32>
    %22 = arith.maximumf %20, %21 : vector<256x128xf32>
    %cst_7 = arith.constant 1.000000e+00 : f32
    %23 = vector.broadcast %cst_7 : f32 to vector<8x256xf32>
    %cst_8 = arith.constant dense<0.000000e+00> : vector<8x128xf32>
    %24 = tpu.matmul %23, %22, %cst_8 {dimension_numbers = #tpu.dot_dimension_numbers<[1], [0], [0], [1], [0, 0, 1, 1], [], []>} : vector<8x256xf32>, vector<256x128xf32>, vector<8x128xf32> -> vector<8x128xf32>
    %c0_i32 = arith.constant 0 : i32
    %25 = arith.cmpi eq, %arg1, %c0_i32 : i32
    %26 = arith.extui %25 : i1 to i32
    %c0_i32_9 = arith.constant 0 : i32
    %27 = arith.cmpi ne, %26, %c0_i32_9 : i32
    scf.if %27 {
      %cst_16 = arith.constant 0.000000e+00 : f32
      %34 = vector.broadcast %cst_16 : f32 to vector<8x128xf32>
      %c0_17 = arith.constant 0 : index
      %c0_18 = arith.constant 0 : index
      %35 = vector.load %arg12[%c0_17, %c0_18] : memref<8x128xf32, #tpu.memory_space<vmem>>, vector<8x128xf32>
      tpu.vector_store %arg12[%c0_17, %c0_18], %34 {strides = array<i32>} : memref<8x128xf32, #tpu.memory_space<vmem>>, vector<8x128xf32>,
    } else {
    }
    %c0_10 = arith.constant 0 : index
    %c0_11 = arith.constant 0 : index
    %28 = vector.load %arg12[%c0_10, %c0_11] : memref<8x128xf32, #tpu.memory_space<vmem>>, vector<8x128xf32>
    %29 = arith.addf %28, %24 : vector<8x128xf32>
    %c0_12 = arith.constant 0 : index
    %c0_13 = arith.constant 0 : index
    %30 = vector.load %arg12[%c0_12, %c0_13] : memref<8x128xf32, #tpu.memory_space<vmem>>, vector<8x128xf32>
    tpu.vector_store %arg12[%c0_12, %c0_13], %29 {strides = array<i32>} : memref<8x128xf32, #tpu.memory_space<vmem>>, vector<8x128xf32>,
    %c0_i32_14 = arith.constant 0 : i32
    %31 = arith.cmpi eq, %arg1, %c0_i32_14 : i32
    %32 = arith.extui %31 : i1 to i32
    %c0_i32_15 = arith.constant 0 : i32
    %33 = arith.cmpi ne, %32, %c0_i32_15 : i32
    scf.if %33 {
      %c0_16 = arith.constant 0 : index
      %c0_17 = arith.constant 0 : index
      %34 = vector.load %arg12[%c0_16, %c0_17] : memref<8x128xf32, #tpu.memory_space<vmem>>, vector<8x128xf32>
      %cst_18 = arith.constant 3.906250e-03 : f32
      %35 = vector.broadcast %cst_18 : f32 to vector<8x128xf32>
      %36 = arith.mulf %34, %35 : vector<8x128xf32>
      %c0_19 = arith.constant 0 : index
      %c0_20 = arith.constant 0 : index
      %37 = vector.load %arg5[%c0_19, %c0_20] : memref<128x128xf32, #tpu.memory_space<vmem>>, vector<128x128xf32>
      %cst_21 = arith.constant dense<0.000000e+00> : vector<8x128xf32>
      %38 = tpu.matmul %36, %37, %cst_21 {dimension_numbers = #tpu.dot_dimension_numbers<[1], [0], [0], [1], [0, 0, 1, 1], [], []>} : vector<8x128xf32>, vector<128x128xf32>, vector<8x128xf32> -> vector<8x128xf32>
      %c0_22 = arith.constant 0 : index
      %c0_23 = arith.constant 0 : index
      %39 = vector.load %arg6[%c0_22, %c0_23] : memref<1x128xf32, #tpu.memory_space<vmem>>, vector<1x128xf32>
      %40 = vector.broadcast %39 : vector<1x128xf32> to vector<8x128xf32>
      %41 = arith.addf %38, %40 : vector<8x128xf32>
      %cst_24 = arith.constant 0.000000e+00 : f32
      %42 = vector.broadcast %cst_24 : f32 to vector<8x128xf32>
      %43 = arith.maximumf %41, %42 : vector<8x128xf32>
      %c0_25 = arith.constant 0 : index
      %c0_26 = arith.constant 0 : index
      %44 = vector.load %arg7[%c0_25, %c0_26] : memref<128x128xf32, #tpu.memory_space<vmem>>, vector<128x128xf32>
      %cst_27 = arith.constant dense<0.000000e+00> : vector<8x128xf32>
      %45 = tpu.matmul %43, %44, %cst_27 {dimension_numbers = #tpu.dot_dimension_numbers<[1], [0], [0], [1], [0, 0, 1, 1], [], []>} : vector<8x128xf32>, vector<128x128xf32>, vector<8x128xf32> -> vector<8x128xf32>
      %c0_28 = arith.constant 0 : index
      %c0_29 = arith.constant 0 : index
      %46 = vector.load %arg8[%c0_28, %c0_29] : memref<1x128xf32, #tpu.memory_space<vmem>>, vector<1x128xf32>
      %47 = vector.broadcast %46 : vector<1x128xf32> to vector<8x128xf32>
      %48 = arith.addf %45, %47 : vector<8x128xf32>
      %cst_30 = arith.constant 0.000000e+00 : f32
      %49 = vector.broadcast %cst_30 : f32 to vector<8x128xf32>
      %50 = arith.maximumf %48, %49 : vector<8x128xf32>
      %c0_31 = arith.constant 0 : index
      %c0_32 = arith.constant 0 : index
      %51 = vector.load %arg9[%c0_31, %c0_32] : memref<128x128xf32, #tpu.memory_space<vmem>>, vector<128x128xf32>
      %cst_33 = arith.constant dense<0.000000e+00> : vector<8x128xf32>
      %52 = tpu.matmul %50, %51, %cst_33 {dimension_numbers = #tpu.dot_dimension_numbers<[1], [0], [0], [1], [0, 0, 1, 1], [], []>} : vector<8x128xf32>, vector<128x128xf32>, vector<8x128xf32> -> vector<8x128xf32>
      %c0_34 = arith.constant 0 : index
      %c0_35 = arith.constant 0 : index
      %53 = vector.load %arg10[%c0_34, %c0_35] : memref<1x128xf32, #tpu.memory_space<vmem>>, vector<1x128xf32>
      %54 = vector.broadcast %53 : vector<1x128xf32> to vector<8x128xf32>
      %55 = arith.addf %52, %54 : vector<8x128xf32>
      %56 = vector.shape_cast %55 : vector<8x128xf32> to vector<1x8x128xf32>
      %c0_36 = arith.constant 0 : index
      %c0_37 = arith.constant 0 : index
      %c0_38 = arith.constant 0 : index
      %57 = vector.load %arg11[%c0_36, %c0_37, %c0_38] : memref<1x8x128xf32, #tpu.memory_space<vmem>>, vector<1x8x128xf32>
      tpu.vector_store %arg11[%c0_36, %c0_37, %c0_38], %56 {strides = array<i32>} : memref<1x8x128xf32, #tpu.memory_space<vmem>>, vector<1x8x128xf32>,
    } else {
    }
    return
  }
  func.func @transform_0(%arg0: i32, %arg1: i32) -> (i32, i32, i32, i32) {
    %c0_i32 = arith.constant 0 : i32
    %c0_i32_0 = arith.constant 0 : i32
    %c0_i32_1 = arith.constant 0 : i32
    %c0_i32_2 = arith.constant 0 : i32
    return %arg0, %c0_i32, %c0_i32_0, %c0_i32_1 : i32, i32, i32, i32
  }
  func.func @transform_1(%arg0: i32, %arg1: i32) -> (i32, i32) {
    %c0_i32 = arith.constant 0 : i32
    %c0_i32_0 = arith.constant 0 : i32
    %c0_i32_1 = arith.constant 0 : i32
    return %c0_i32, %c0_i32_0 : i32, i32
  }
  func.func @transform_2(%arg0: i32, %arg1: i32) -> (i32, i32) {
    %c0_i32 = arith.constant 0 : i32
    %c0_i32_0 = arith.constant 0 : i32
    %c0_i32_1 = arith.constant 0 : i32
    return %c0_i32, %c0_i32_0 : i32, i32
  }
  func.func @transform_3(%arg0: i32, %arg1: i32) -> (i32, i32) {
    %c0_i32 = arith.constant 0 : i32
    %c0_i32_0 = arith.constant 0 : i32
    %c0_i32_1 = arith.constant 0 : i32
    return %c0_i32, %c0_i32_0 : i32, i32
  }
  func.func @transform_4(%arg0: i32, %arg1: i32) -> (i32, i32) {
    %c0_i32 = arith.constant 0 : i32
    %c0_i32_0 = arith.constant 0 : i32
    %c0_i32_1 = arith.constant 0 : i32
    return %c0_i32, %c0_i32_0 : i32, i32
  }
  func.func @transform_5(%arg0: i32, %arg1: i32) -> (i32, i32) {
    %c0_i32 = arith.constant 0 : i32
    %c0_i32_0 = arith.constant 0 : i32
    %c0_i32_1 = arith.constant 0 : i32
    return %c0_i32, %c0_i32_0 : i32, i32
  }
  func.func @transform_6(%arg0: i32, %arg1: i32) -> (i32, i32) {
    %c0_i32 = arith.constant 0 : i32
    %c0_i32_0 = arith.constant 0 : i32
    %c0_i32_1 = arith.constant 0 : i32
    return %c0_i32, %c0_i32_0 : i32, i32
  }
  func.func @transform_7(%arg0: i32, %arg1: i32) -> (i32, i32) {
    %c0_i32 = arith.constant 0 : i32
    %c0_i32_0 = arith.constant 0 : i32
    %c0_i32_1 = arith.constant 0 : i32
    return %c0_i32, %c0_i32_0 : i32, i32
  }
  func.func @transform_8(%arg0: i32, %arg1: i32) -> (i32, i32) {
    %c0_i32 = arith.constant 0 : i32
    %c0_i32_0 = arith.constant 0 : i32
    %c0_i32_1 = arith.constant 0 : i32
    return %c0_i32, %c0_i32_0 : i32, i32
  }
  func.func @transform_9(%arg0: i32, %arg1: i32) -> (i32, i32, i32) {
    %c0_i32 = arith.constant 0 : i32
    %c0_i32_0 = arith.constant 0 : i32
    %c0_i32_1 = arith.constant 0 : i32
    return %arg0, %c0_i32, %c0_i32_0 : i32, i32, i32
  }
}

</mosaic_0001>

<llo_original>
// kernel: tpu_custom_call.1
$region0: #{tpu_custom_call.1}
  #allocation0 [shape = 'u32[]', space=smem, size = 0x4, offset = 0x4, fixed_abs, tag = 'smem constant byte address 0x4 - core index']
  #allocation1 [shape = 'u32[144,128]{1,0:T(1,128)}', space=vmem, size = 0x12000, scoped, tag = 'internal scratch']
  #allocation2 [shape = 'f32[8,128]{1,0:T(8,128)}', space=vmem, size = 0x1000, scoped, tag = 'scratch operand']
  %s0 = inlined_call_operand.vmem [shape: f32[2,18,18,4], index: 0, kind: input, shape index: {}]
  %s1 = inlined_call_operand.vmem [shape: f32[36,128], index: 1, kind: input, shape index: {}]
  %s2 = inlined_call_operand.vmem [shape: f32[1,128], index: 2, kind: input, shape index: {}]
  %s3 = inlined_call_operand.vmem [shape: f32[128,128], index: 3, kind: input, shape index: {}]
  %s4 = inlined_call_operand.vmem [shape: f32[1,128], index: 4, kind: input, shape index: {}]
  %s5 = inlined_call_operand.vmem [shape: f32[128,128], index: 5, kind: input, shape index: {}]
  %s6 = inlined_call_operand.vmem [shape: f32[1,128], index: 6, kind: input, shape index: {}]
  %s7 = inlined_call_operand.vmem [shape: f32[128,128], index: 7, kind: input, shape index: {}]
  %s8 = inlined_call_operand.vmem [shape: f32[1,128], index: 8, kind: input, shape index: {}]
  %s9 = inlined_call_operand.hbm [shape: f32[2,8,128], index: 9, kind: output, shape index: {}]
  %s10 = sld [smem:[#allocation0]]
  $region77: #{tpu_custom_call.1} parent=0
    _
  %s12 = ssub.s32 1, %s10
  %s13 = scalar_select 0, %s12, %s10
  $region1: #{tpu_custom_call.1} parent=0
    #allocation3 [shape = 'u8[8192]{0}', space=vmem, size = 0x2000, scoped, tag = 'output window, operand 0']
    #allocation4 [shape = 's32[2]{0}', space=sflag, size = 0x8, scoped, tag = 'scoped memory for tpu_custom_call.1']
    %14 = vsyncpa [#allocation4], 0
    %s15 = scalar_lea.sflag [#allocation4], 1
    %16 = vsyncpa %s15, 0
    loop: start=0, step=1, limit=4
    $region2: #{tpu_custom_call.1} parent=1 // loop_pre_header
      _
    $region3: #{tpu_custom_call.1} parent=1 // loop_header
      %s18 = sphi 0, %s22
      %p19 = scmp.ge.s32.totalorder %s18, 4
      %s25 = sphi 0, %s37
      %s26 = sphi 0, %s33
      %s27 = sphi 0, %s25
      %s28 = sphi 0, %s26
      %s29 = sphi 0, %s27
      %s30 = sphi 0, %s28
      %s40 = sphi 0, %s42
      %s43 = sphi 0, %s40
      %s44 = sphi 0, %s43
      %s60 = sphi 0, %s44
      %s64 = sphi 0, %s64
      %s66 = sphi 0, %s64
      %s67 = sphi 0, %s66
      %s81 = sphi 0, %s67
      %s85 = sphi 0, %s85
      %s87 = sphi 0, %s85
      %s88 = sphi 0, %s87
      %s102 = sphi 0, %s88
      %s106 = sphi 0, %s106
      %s108 = sphi 0, %s106
      %s109 = sphi 0, %s108
      %s123 = sphi 0, %s109
      %s127 = sphi 0, %s127
      %s129 = sphi 0, %s127
      %s130 = sphi 0, %s129
      %s144 = sphi 0, %s130
      %s148 = sphi 0, %s148
      %s150 = sphi 0, %s148
      %s151 = sphi 0, %s150
      %s165 = sphi 0, %s151
      %s169 = sphi 0, %s169
      %s171 = sphi 0, %s169
      %s172 = sphi 0, %s171
      %s186 = sphi 0, %s172
      %s190 = sphi 0, %s190
      %s192 = sphi 0, %s190
      %s193 = sphi 0, %s192
      %s207 = sphi 0, %s193
      %s211 = sphi 0, %s211
      %s213 = sphi 0, %s211
      %s214 = sphi 0, %s213
      %s228 = sphi 0, %s214
      %s234 = sphi 0, %s236
      %s237 = sphi 0, %s234
      %s238 = sphi 0, %s237
      %s254 = sphi 0, %s238
    $region4: #{tpu_custom_call.1} parent=1 // loop_header_branch
      %21 = sbr.rel (%p19) target = $region8
    $region5: #{tpu_custom_call.1} parent=1 // loop_body
      %s23 = ssub.s32 %s18, 1
      %s24 = ssub.s32 %s18, 2
      %s31 = sadd.s32 1, %s26
      %p32 = scmp.ge.s32.totalorder %s31, 1
      %s33 = scalar_select %p32, 0, %s31
      %s34 = sadd.s32 1, %s25
      %s35 = scalar_select %p32, %s34, %s25
      %p36 = scmp.ge.s32.totalorder %s35, 2
      %s37 = scalar_select %p36, 0, %s35
      %s38 = ssub.s32 %s25, %s37
      %p39 = scmp.eq.s32.totalorder %s38, 0
      %s41 = sadd.s32 %s40, 1
      %s42 = scalar_select %p39, %s40, %s41
      %p45 = pneg %p39
      %p46 = scmp.eq.s32.totalorder %s18, 1
      %p47 = por %p45, %p46
      %p48 = scmp.ne.s32.totalorder %s40, %s43
      %p49 = scmp.eq.s32.totalorder %s18, 0
      %p50 = por %p48, %p49
      %p51 = scmp.ne.s32.totalorder %s40, %s43
      %p52 = scmp.eq.s32.totalorder %s23, 1
      %p53 = por %p51, %p52
      %p54 = scmp.ne.s32.totalorder %s43, %s44
      %p55 = scmp.eq.s32.totalorder %s23, 0
      %p56 = por %p54, %p55
      %p57 = scmp.ne.s32.totalorder %s43, %s44
      %p58 = scmp.eq.s32.totalorder %s24, 1
      %p59 = por %p57, %p58
      %p61 = scmp.ne.s32.totalorder %s44, %s60
      %p62 = scmp.eq.s32.totalorder %s24, 0
      %p63 = por %p61, %p62
      %s65 = sadd.s32 %s64, 1
      %p68 = scmp.eq.s32.totalorder %s18, 1
      %p69 = scmp.ne.s32.totalorder %s64, %s66
      %p70 = scmp.eq.s32.totalorder %s18, 0
      %p71 = por %p69, %p70
      %p72 = scmp.ne.s32.totalorder %s64, %s66
      %p73 = scmp.eq.s32.totalorder %s23, 1
      %p74 = por %p72, %p73
      %p75 = scmp.ne.s32.totalorder %s66, %s67
      %p76 = scmp.eq.s32.totalorder %s23, 0
      %p77 = por %p75, %p76
      %p78 = scmp.ne.s32.totalorder %s66, %s67
      %p79 = scmp.eq.s32.totalorder %s24, 1
      %p80 = por %p78, %p79
      %p82 = scmp.ne.s32.totalorder %s67, %s81
      %p83 = scmp.eq.s32.totalorder %s24, 0
      %p84 = por %p82, %p83
      %s86 = sadd.s32 %s85, 1
      %p89 = scmp.eq.s32.totalorder %s18, 1
      %p90 = scmp.ne.s32.totalorder %s85, %s87
      %p91 = scmp.eq.s32.totalorder %s18, 0
      %p92 = por %p90, %p91
      %p93 = scmp.ne.s32.totalorder %s85, %s87
      %p94 = scmp.eq.s32.totalorder %s23, 1
      %p95 = por %p93, %p94
      %p96 = scmp.ne.s32.totalorder %s87, %s88
      %p97 = scmp.eq.s32.totalorder %s23, 0
      %p98 = por %p96, %p97
      %p99 = scmp.ne.s32.totalorder %s87, %s88
      %p100 = scmp.eq.s32.totalorder %s24, 1
      %p101 = por %p99, %p100
      %p103 = scmp.ne.s32.totalorder %s88, %s102
      %p104 = scmp.eq.s32.totalorder %s24, 0
      %p105 = por %p103, %p104
      %s107 = sadd.s32 %s106, 1
      %p110 = scmp.eq.s32.totalorder %s18, 1
      %p111 = scmp.ne.s32.totalorder %s106, %s108
      %p112 = scmp.eq.s32.totalorder %s18, 0
      %p113 = por %p111, %p112
      %p114 = scmp.ne.s32.totalorder %s106, %s108
      %p115 = scmp.eq.s32.totalorder %s23, 1
      %p116 = por %p114, %p115
      %p117 = scmp.ne.s32.totalorder %s108, %s109
      %p118 = scmp.eq.s32.totalorder %s23, 0
      %p119 = por %p117, %p118
      %p120 = scmp.ne.s32.totalorder %s108, %s109
      %p121 = scmp.eq.s32.totalorder %s24, 1
      %p122 = por %p120, %p121
      %p124 = scmp.ne.s32.totalorder %s109, %s123
      %p125 = scmp.eq.s32.totalorder %s24, 0
      %p126 = por %p124, %p125
      %s128 = sadd.s32 %s127, 1
      %p131 = scmp.eq.s32.totalorder %s18, 1
      %p132 = scmp.ne.s32.totalorder %s127, %s129
      %p133 = scmp.eq.s32.totalorder %s18, 0
      %p134 = por %p132, %p133
      %p135 = scmp.ne.s32.totalorder %s127, %s129
      %p136 = scmp.eq.s32.totalorder %s23, 1
      %p137 = por %p135, %p136
      %p138 = scmp.ne.s32.totalorder %s129, %s130
      %p139 = scmp.eq.s32.totalorder %s23, 0
      %p140 = por %p138, %p139
      %p141 = scmp.ne.s32.totalorder %s129, %s130
      %p142 = scmp.eq.s32.totalorder %s24, 1
      %p143 = por %p141, %p142
      %p145 = scmp.ne.s32.totalorder %s130, %s144
      %p146 = scmp.eq.s32.totalorder %s24, 0
      %p147 = por %p145, %p146
      %s149 = sadd.s32 %s148, 1
      %p152 = scmp.eq.s32.totalorder %s18, 1
      %p153 = scmp.ne.s32.totalorder %s148, %s150
      %p154 = scmp.eq.s32.totalorder %s18, 0
      %p155 = por %p153, %p154
      %p156 = scmp.ne.s32.totalorder %s148, %s150
      %p157 = scmp.eq.s32.totalorder %s23, 1
      %p158 = por %p156, %p157
      %p159 = scmp.ne.s32.totalorder %s150, %s151
      %p160 = scmp.eq.s32.totalorder %s23, 0
      %p161 = por %p159, %p160
      %p162 = scmp.ne.s32.totalorder %s150, %s151
      %p163 = scmp.eq.s32.totalorder %s24, 1
      %p164 = por %p162, %p163
      %p166 = scmp.ne.s32.totalorder %s151, %s165
      %p167 = scmp.eq.s32.totalorder %s24, 0
      %p168 = por %p166, %p167
      %s170 = sadd.s32 %s169, 1
      %p173 = scmp.eq.s32.totalorder %s18, 1
      %p174 = scmp.ne.s32.totalorder %s169, %s171
      %p175 = scmp.eq.s32.totalorder %s18, 0
      %p176 = por %p174, %p175
      %p177 = scmp.ne.s32.totalorder %s169, %s171
      %p178 = scmp.eq.s32.totalorder %s23, 1
      %p179 = por %p177, %p178
      %p180 = scmp.ne.s32.totalorder %s171, %s172
      %p181 = scmp.eq.s32.totalorder %s23, 0
      %p182 = por %p180, %p181
      %p183 = scmp.ne.s32.totalorder %s171, %s172
      %p184 = scmp.eq.s32.totalorder %s24, 1
      %p185 = por %p183, %p184
      %p187 = scmp.ne.s32.totalorder %s172, %s186
      %p188 = scmp.eq.s32.totalorder %s24, 0
      %p189 = por %p187, %p188
      %s191 = sadd.s32 %s190, 1
      %p194 = scmp.eq.s32.totalorder %s18, 1
      %p195 = scmp.ne.s32.totalorder %s190, %s192
      %p196 = scmp.eq.s32.totalorder %s18, 0
      %p197 = por %p195, %p196
      %p198 = scmp.ne.s32.totalorder %s190, %s192
      %p199 = scmp.eq.s32.totalorder %s23, 1
      %p200 = por %p198, %p199
      %p201 = scmp.ne.s32.totalorder %s192, %s193
      %p202 = scmp.eq.s32.totalorder %s23, 0
      %p203 = por %p201, %p202
      %p204 = scmp.ne.s32.totalorder %s192, %s193
      %p205 = scmp.eq.s32.totalorder %s24, 1
      %p206 = por %p204, %p205
      %p208 = scmp.ne.s32.totalorder %s193, %s207
      %p209 = scmp.eq.s32.totalorder %s24, 0
      %p210 = por %p208, %p209
      %s212 = sadd.s32 %s211, 1
      %p215 = scmp.eq.s32.totalorder %s18, 1
      %p216 = scmp.ne.s32.totalorder %s211, %s213
      %p217 = scmp.eq.s32.totalorder %s18, 0
      %p218 = por %p216, %p217
      %p219 = scmp.ne.s32.totalorder %s211, %s213
      %p220 = scmp.eq.s32.totalorder %s23, 1
      %p221 = por %p219, %p220
      %p222 = scmp.ne.s32.totalorder %s213, %s214
      %p223 = scmp.eq.s32.totalorder %s23, 0
      %p224 = por %p222, %p223
      %p225 = scmp.ne.s32.totalorder %s213, %s214
      %p226 = scmp.eq.s32.totalorder %s24, 1
      %p227 = por %p225, %p226
      %p229 = scmp.ne.s32.totalorder %s214, %s228
      %p230 = scmp.eq.s32.totalorder %s24, 0
      %p231 = por %p229, %p230
      %s232 = ssub.s32 %s25, %s37
      %p233 = scmp.eq.s32.totalorder %s232, 0
      %s235 = sadd.s32 %s234, 1
      %s236 = scalar_select %p233, %s234, %s235
      %p239 = pneg %p233
      %p240 = scmp.eq.s32.totalorder %s18, 1
      %p241 = por %p239, %p240
      %p242 = scmp.ne.s32.totalorder %s234, %s237
      %p243 = scmp.eq.s32.totalorder %s18, 0
      %p244 = por %p242, %p243
      %p245 = scmp.ne.s32.totalorder %s234, %s237
      %p246 = scmp.eq.s32.totalorder %s23, 1
      %p247 = por %p245, %p246
      %p248 = scmp.ne.s32.totalorder %s237, %s238
      %p249 = scmp.eq.s32.totalorder %s23, 0
      %p250 = por %p248, %p249
      %p251 = scmp.ne.s32.totalorder %s237, %s238
      %p252 = scmp.eq.s32.totalorder %s24, 1
      %p253 = por %p251, %p252
      %p255 = scmp.ne.s32.totalorder %s238, %s254
      %p256 = scmp.eq.s32.totalorder %s24, 0
      %p257 = por %p255, %p256
      %p258 = scmp.le.s32.totalorder 1, %s18
      %p259 = scmp.lt.s32.totalorder %s18, 3
      %p260 = pnand %p258, %p259
      %p261 = pneg %p260
      // Predicated region
      $region9: #{tpu_custom_call.1} parent=5 // pred_check
        _
      $region10: #{tpu_custom_call.1} parent=5 // pred_check_branch
        %263 = sbr.rel (%p260) target = $region12
      $region11: #{tpu_custom_call.1} parent=5 // pred_region
        %s264 = ssub.s32 %s18, 1
        // Predicated region
        $region13: #{tpu_custom_call.1} parent=11 // pred_check
          %p265 = pneg %p77
        $region14: #{tpu_custom_call.1} parent=11 // pred_check_branch
          %267 = sbr.rel (%p265) target = $region16
        $region15: #{tpu_custom_call.1} parent=11 // pred_region
          _
        $region16: #{tpu_custom_call.1} parent=11 // pred_fallthru
          _
        // Predicated region
        $region17: #{tpu_custom_call.1} parent=11 // pred_check
          %p268 = pneg %p98
        $region18: #{tpu_custom_call.1} parent=11 // pred_check_branch
          %270 = sbr.rel (%p268) target = $region20
        $region19: #{tpu_custom_call.1} parent=11 // pred_region
          _
        $region20: #{tpu_custom_call.1} parent=11 // pred_fallthru
          _
        // Predicated region
        $region21: #{tpu_custom_call.1} parent=11 // pred_check
          %p271 = pneg %p119
        $region22: #{tpu_custom_call.1} parent=11 // pred_check_branch
          %273 = sbr.rel (%p271) target = $region24
        $region23: #{tpu_custom_call.1} parent=11 // pred_region
          _
        $region24: #{tpu_custom_call.1} parent=11 // pred_fallthru
          _
        // Predicated region
        $region25: #{tpu_custom_call.1} parent=11 // pred_check
          %p274 = pneg %p140
        $region26: #{tpu_custom_call.1} parent=11 // pred_check_branch
          %276 = sbr.rel (%p274) target = $region28
        $region27: #{tpu_custom_call.1} parent=11 // pred_region
          _
        $region28: #{tpu_custom_call.1} parent=11 // pred_fallthru
          _
        // Predicated region
        $region29: #{tpu_custom_call.1} parent=11 // pred_check
          %p277 = pneg %p161
        $region30: #{tpu_custom_call.1} parent=11 // pred_check_branch
          %279 = sbr.rel (%p277) target = $region32
        $region31: #{tpu_custom_call.1} parent=11 // pred_region
          _
        $region32: #{tpu_custom_call.1} parent=11 // pred_fallthru
          _
        // Predicated region
        $region33: #{tpu_custom_call.1} parent=11 // pred_check
          %p280 = pneg %p182
        $region34: #{tpu_custom_call.1} parent=11 // pred_check_branch
          %282 = sbr.rel (%p280) target = $region36
        $region35: #{tpu_custom_call.1} parent=11 // pred_region
          _
        $region36: #{tpu_custom_call.1} parent=11 // pred_fallthru
          _
        // Predicated region
        $region37: #{tpu_custom_call.1} parent=11 // pred_check
          %p283 = pneg %p203
        $region38: #{tpu_custom_call.1} parent=11 // pred_check_branch
          %285 = sbr.rel (%p283) target = $region40
        $region39: #{tpu_custom_call.1} parent=11 // pred_region
          _
        $region40: #{tpu_custom_call.1} parent=11 // pred_fallthru
          _
        // Predicated region
        $region41: #{tpu_custom_call.1} parent=11 // pred_check
          %p286 = pneg %p224
        $region42: #{tpu_custom_call.1} parent=11 // pred_check_branch
          %288 = sbr.rel (%p286) target = $region44
        $region43: #{tpu_custom_call.1} parent=11 // pred_region
          _
        $region44: #{tpu_custom_call.1} parent=11 // pred_fallthru
          _
      $region12: #{tpu_custom_call.1} parent=5 // pred_fallthru
        _
      %p289 = scmp.lt.s32.totalorder %s18, 2
      // Predicated region
      $region45: #{tpu_custom_call.1} parent=5 // pred_check
        %p290 = pneg %p289
      $region46: #{tpu_custom_call.1} parent=5 // pred_check_branch
        %292 = sbr.rel (%p290) target = $region48
      $region47: #{tpu_custom_call.1} parent=5 // pred_region
        // Predicated region
        $region49: #{tpu_custom_call.1} parent=47 // pred_check
          %p293 = pneg %p50
        $region50: #{tpu_custom_call.1} parent=47 // pred_check_branch
          %295 = sbr.rel (%p293) target = $region52
        $region51: #{tpu_custom_call.1} parent=47 // pred_region
          %p296 = scmp.lt.s32.totalorder %s25, 1
          %s297 = scalar_select %p296, %s25, 1
          %s298 = smul.addr %s297, 54
          %s299 = smul.addr %s298, 8
          %s300 = scalar_lea.vmem %s0, %s299
        $region52: #{tpu_custom_call.1} parent=47 // pred_fallthru
          _
      $region48: #{tpu_custom_call.1} parent=5 // pred_fallthru
        _
      %p301 = scmp.le.s32.totalorder 1, %s18
      %p302 = scmp.lt.s32.totalorder %s18, 3
      %p303 = pnand %p301, %p302
      %p304 = pneg %p303
      // Predicated region
      $region53: #{tpu_custom_call.1} parent=5 // pred_check
        _
      $region54: #{tpu_custom_call.1} parent=5 // pred_check_branch
        %306 = sbr.rel (%p303) target = $region56
      $region55: #{tpu_custom_call.1} parent=5 // pred_region
        %s307 = ssub.s32 %s18, 1
        %p308 = scmp.lt.s32.totalorder %s27, 1
        %s309 = scalar_select %p308, %s27, 1
        %s310 = smul.addr %s309, 54
        %s311 = smul.addr %s310, 8
        %s312 = scalar_lea.vmem %s0, %s311
        %p313 = pneg %p56
        %p314 = pneg %p53
        %p315 = pneg %p77
        %p316 = pneg %p74
        %p317 = pneg %p98
        %p318 = pneg %p95
        %p319 = pneg %p119
        %p320 = pneg %p116
        %p321 = pneg %p140
        %p322 = pneg %p137
        %p323 = pneg %p161
        %p324 = pneg %p158
        %p325 = pneg %p182
        %p326 = pneg %p179
        %p327 = pneg %p203
        %p328 = pneg %p200
        %p329 = pneg %p224
        %p330 = pneg %p221
        %p331 = pneg %p250
        %p332 = pneg %p247
        %s333 = sand.u32 %s237, 1
        %s334 = scalar_lea.sflag [#allocation4], %s333
        %s335 = sand.u32 %s237, 1
        %s336 = smul.addr %s335, 8
        %s337 = scalar_lea.vmem [#allocation3], %s336
        %p338 = scmp.lt.s32.totalorder %s27, 1
        %s339 = scalar_select %p338, %s27, 1
        %s340 = smul.addr %s339, 54
        %s341 = smul.addr %s340, 8
        %s342 = scalar_lea.vmem %s0, %s341
        %s343 = smul.u32 %s28, 16
        %s344 = smul.u32 %s343, 24
        %s345 = scalar_lea.vmem %s342, %s344
        %v346 = vld [vmem:[%s345] sm:$0xff]
        %v347 = vld [vmem:[%s345 + $0x8] sm:$0xff]
        %v348 = vld [vmem:[%s345 + $0x10] sm:$0x3]
        %v349 = vld [vmem:[%s345 + $0x18] sm:$0xff]
        %v350 = vld [vmem:[%s345 + $0x20] sm:$0xff]
        %v351 = vld [vmem:[%s345 + $0x28] sm:$0x3]
        %v352 = vld [vmem:[%s345 + $0x30] sm:$0xff]
        %v353 = vld [vmem:[%s345 + $0x38] sm:$0xff]
        %v354 = vld [vmem:[%s345 + $0x40] sm:$0x3]
        %v355 = vld [vmem:[%s345 + $0x48] sm:$0xff]
        %v356 = vld [vmem:[%s345 + $0x50] sm:$0xff]
        %v357 = vld [vmem:[%s345 + $0x58] sm:$0x3]
        %v358 = vld [vmem:[%s345 + $0x60] sm:$0xff]
        %v359 = vld [vmem:[%s345 + $0x68] sm:$0xff]
        %v360 = vld [vmem:[%s345 + $0x70] sm:$0x3]
        %v361 = vld [vmem:[%s345 + $0x78] sm:$0xff]
        %v362 = vld [vmem:[%s345 + $0x80] sm:$0xff]
        %v363 = vld [vmem:[%s345 + $0x88] sm:$0x3]
        %v364 = vld [vmem:[%s345 + $0x90] sm:$0xff]
        %v365 = vld [vmem:[%s345 + $0x98] sm:$0xff]
        %v366 = vld [vmem:[%s345 + $0xa0] sm:$0x3]
        %v367 = vld [vmem:[%s345 + $0xa8] sm:$0xff]
        %v368 = vld [vmem:[%s345 + $0xb0] sm:$0xff]
        %v369 = vld [vmem:[%s345 + $0xb8] sm:$0x3]
        %v370 = vld [vmem:[%s345 + $0xc0] sm:$0xff]
        %v371 = vld [vmem:[%s345 + $0xc8] sm:$0xff]
        %v372 = vld [vmem:[%s345 + $0xd0] sm:$0x3]
        %v373 = vld [vmem:[%s345 + $0xd8] sm:$0xff]
        %v374 = vld [vmem:[%s345 + $0xe0] sm:$0xff]
        %v375 = vld [vmem:[%s345 + $0xe8] sm:$0x3]
        %v376 = vld [vmem:[%s345 + $0xf0] sm:$0xff]
        %v377 = vld [vmem:[%s345 + $0xf8] sm:$0xff]
        %v378 = vld [vmem:[%s345 + $0x100] sm:$0x3]
        %v379 = vld [vmem:[%s345 + $0x108] sm:$0xff]
        %v380 = vld [vmem:[%s345 + $0x110] sm:$0xff]
        %v381 = vld [vmem:[%s345 + $0x118] sm:$0x3]
        %v382 = vld [vmem:[%s345 + $0x120] sm:$0xff]
        %v383 = vld [vmem:[%s345 + $0x128] sm:$0xff]
        %v384 = vld [vmem:[%s345 + $0x130] sm:$0x3]
        %v385 = vld [vmem:[%s345 + $0x138] sm:$0xff]
        %v386 = vld [vmem:[%s345 + $0x140] sm:$0xff]
        %v387 = vld [vmem:[%s345 + $0x148] sm:$0x3]
        %v388 = vld [vmem:[%s345 + $0x150] sm:$0xff]
        %v389 = vld [vmem:[%s345 + $0x158] sm:$0xff]
        %v390 = vld [vmem:[%s345 + $0x160] sm:$0x3]
        %v391 = vld [vmem:[%s345 + $0x168] sm:$0xff]
        %v392 = vld [vmem:[%s345 + $0x170] sm:$0xff]
        %v393 = vld [vmem:[%s345 + $0x178] sm:$0x3]
        %v394 = vld [vmem:[%s345 + $0x180] sm:$0xff]
        %v395 = vld [vmem:[%s345 + $0x188] sm:$0xff]
        %v396 = vld [vmem:[%s345 + $0x190] sm:$0x3]
        %v397 = vld [vmem:[%s345 + $0x198] sm:$0xff]
        %v398 = vld [vmem:[%s345 + $0x1a0] sm:$0xff]
        %v399 = vld [vmem:[%s345 + $0x1a8] sm:$0x3]
        %vm448 = vcmask 1046528
        %v449 = vrot.slane %v346, 1
        %v450 = vrot.slane %v347, 1
        %v451 = vsel %vm448, %v449, %v450
        %v452 = vrot.slane %v348, 1
        %v453 = vsel %vm448, %v450, %v452
        %v454 = vrot.slane %v349, 1
        %v455 = vrot.slane %v350, 1
        %v456 = vsel %vm448, %v454, %v455
        %v457 = vrot.slane %v351, 1
        %v458 = vsel %vm448, %v455, %v457
        %v459 = vrot.slane %v352, 1
        %v460 = vrot.slane %v353, 1
        %v461 = vsel %vm448, %v459, %v460
        %v462 = vrot.slane %v354, 1
        %v463 = vsel %vm448, %v460, %v462
        %v464 = vrot.slane %v355, 1
        %v465 = vrot.slane %v356, 1
        %v466 = vsel %vm448, %v464, %v465
        %v467 = vrot.slane %v357, 1
        %v468 = vsel %vm448, %v465, %v467
        %v469 = vrot.slane %v358, 1
        %v470 = vrot.slane %v359, 1
        %v471 = vsel %vm448, %v469, %v470
        %v472 = vrot.slane %v360, 1
        %v473 = vsel %vm448, %v470, %v472
        %v474 = vrot.slane %v361, 1
        %v475 = vrot.slane %v362, 1
        %v476 = vsel %vm448, %v474, %v475
        %v477 = vrot.slane %v363, 1
        %v478 = vsel %vm448, %v475, %v477
        %v479 = vrot.slane %v364, 1
        %v480 = vrot.slane %v365, 1
        %v481 = vsel %vm448, %v479, %v480
        %v482 = vrot.slane %v366, 1
        %v483 = vsel %vm448, %v480, %v482
        %v484 = vrot.slane %v367, 1
        %v485 = vrot.slane %v368, 1
        %v486 = vsel %vm448, %v484, %v485
        %v487 = vrot.slane %v369, 1
        %v488 = vsel %vm448, %v485, %v487
        %v489 = vrot.slane %v370, 1
        %v490 = vrot.slane %v371, 1
        %v491 = vsel %vm448, %v489, %v490
        %v492 = vrot.slane %v372, 1
        %v493 = vsel %vm448, %v490, %v492
        %v494 = vrot.slane %v373, 1
        %v495 = vrot.slane %v374, 1
        %v496 = vsel %vm448, %v494, %v495
        %v497 = vrot.slane %v375, 1
        %v498 = vsel %vm448, %v495, %v497
        %v499 = vrot.slane %v376, 1
        %v500 = vrot.slane %v377, 1
        %v501 = vsel %vm448, %v499, %v500
        %v502 = vrot.slane %v378, 1
        %v503 = vsel %vm448, %v500, %v502
        %v504 = vrot.slane %v379, 1
        %v505 = vrot.slane %v380, 1
        %v506 = vsel %vm448, %v504, %v505
        %v507 = vrot.slane %v381, 1
        %v508 = vsel %vm448, %v505, %v507
        %v509 = vrot.slane %v382, 1
        %v510 = vrot.slane %v383, 1
        %v511 = vsel %vm448, %v509, %v510
        %v512 = vrot.slane %v384, 1
        %v513 = vsel %vm448, %v510, %v512
        %v514 = vrot.slane %v385, 1
        %v515 = vrot.slane %v386, 1
        %v516 = vsel %vm448, %v514, %v515
        %v517 = vrot.slane %v387, 1
        %v518 = vsel %vm448, %v515, %v517
        %v519 = vrot.slane %v388, 1
        %v520 = vrot.slane %v389, 1
        %v521 = vsel %vm448, %v519, %v520
        %v522 = vrot.slane %v390, 1
        %v523 = vsel %vm448, %v520, %v522
        %v524 = vrot.slane %v391, 1
        %v525 = vrot.slane %v392, 1
        %v526 = vsel %vm448, %v524, %v525
        %v527 = vrot.slane %v393, 1
        %v528 = vsel %vm448, %v525, %v527
        %529 = vrot.lane.b32.xlu0 %v451, 4
        %v530 = vpop.permute.xlu0 %529
        %531 = vrot.lane.b32.xlu0 %v453, 4
        %v532 = vpop.permute.xlu0 %531
        %533 = vrot.lane.b32.xlu0 %v456, 4
        %v534 = vpop.permute.xlu0 %533
        %535 = vrot.lane.b32.xlu0 %v458, 4
        %v536 = vpop.permute.xlu0 %535
        %537 = vrot.lane.b32.xlu0 %v461, 4
        %v538 = vpop.permute.xlu0 %537
        %539 = vrot.lane.b32.xlu0 %v463, 4
        %v540 = vpop.permute.xlu0 %539
        %541 = vrot.lane.b32.xlu0 %v466, 4
        %v542 = vpop.permute.xlu0 %541
        %543 = vrot.lane.b32.xlu0 %v468, 4
        %v544 = vpop.permute.xlu0 %543
        %545 = vrot.lane.b32.xlu0 %v471, 4
        %v546 = vpop.permute.xlu0 %545
        %547 = vrot.lane.b32.xlu0 %v473, 4
        %v548 = vpop.permute.xlu0 %547
        %549 = vrot.lane.b32.xlu0 %v476, 4
        %v550 = vpop.permute.xlu0 %549
        %551 = vrot.lane.b32.xlu0 %v478, 4
        %v552 = vpop.permute.xlu0 %551
        %553 = vrot.lane.b32.xlu0 %v481, 4
        %v554 = vpop.permute.xlu0 %553
        %555 = vrot.lane.b32.xlu0 %v483, 4
        %v556 = vpop.permute.xlu0 %555
        %557 = vrot.lane.b32.xlu0 %v486, 4
        %v558 = vpop.permute.xlu0 %557
        %559 = vrot.lane.b32.xlu0 %v488, 4
        %v560 = vpop.permute.xlu0 %559
        %561 = vrot.lane.b32.xlu0 %v491, 4
        %v562 = vpop.permute.xlu0 %561
        %563 = vrot.lane.b32.xlu0 %v493, 4
        %v564 = vpop.permute.xlu0 %563
        %565 = vrot.lane.b32.xlu0 %v496, 4
        %v566 = vpop.permute.xlu0 %565
        %567 = vrot.lane.b32.xlu0 %v498, 4
        %v568 = vpop.permute.xlu0 %567
        %569 = vrot.lane.b32.xlu0 %v501, 4
        %v570 = vpop.permute.xlu0 %569
        %571 = vrot.lane.b32.xlu0 %v503, 4
        %v572 = vpop.permute.xlu0 %571
        %573 = vrot.lane.b32.xlu0 %v506, 4
        %v574 = vpop.permute.xlu0 %573
        %575 = vrot.lane.b32.xlu0 %v508, 4
        %v576 = vpop.permute.xlu0 %575
        %577 = vrot.lane.b32.xlu0 %v511, 4
        %v578 = vpop.permute.xlu0 %577
        %579 = vrot.lane.b32.xlu0 %v513, 4
        %v580 = vpop.permute.xlu0 %579
        %581 = vrot.lane.b32.xlu0 %v516, 4
        %v582 = vpop.permute.xlu0 %581
        %583 = vrot.lane.b32.xlu0 %v518, 4
        %v584 = vpop.permute.xlu0 %583
        %585 = vrot.lane.b32.xlu0 %v521, 4
        %v586 = vpop.permute.xlu0 %585
        %587 = vrot.lane.b32.xlu0 %v523, 4
        %v588 = vpop.permute.xlu0 %587
        %589 = vrot.lane.b32.xlu0 %v526, 4
        %v590 = vpop.permute.xlu0 %589
        %591 = vrot.lane.b32.xlu0 %v528, 4
        %v592 = vpop.permute.xlu0 %591
        %vm625 = vcmask 1045504
        %v626 = vrot.slane %v346, 2
        %v627 = vrot.slane %v347, 2
        %v628 = vsel %vm625, %v626, %v627
        %v629 = vrot.slane %v348, 2
        %v630 = vsel %vm625, %v627, %v629
        %v631 = vrot.slane %v349, 2
        %v632 = vrot.slane %v350, 2
        %v633 = vsel %vm625, %v631, %v632
        %v634 = vrot.slane %v351, 2
        %v635 = vsel %vm625, %v632, %v634
        %v636 = vrot.slane %v352, 2
        %v637 = vrot.slane %v353, 2
        %v638 = vsel %vm625, %v636, %v637
        %v639 = vrot.slane %v354, 2
        %v640 = vsel %vm625, %v637, %v639
        %v641 = vrot.slane %v355, 2
        %v642 = vrot.slane %v356, 2
        %v643 = vsel %vm625, %v641, %v642
        %v644 = vrot.slane %v357, 2
        %v645 = vsel %vm625, %v642, %v644
        %v646 = vrot.slane %v358, 2
        %v647 = vrot.slane %v359, 2
        %v648 = vsel %vm625, %v646, %v647
        %v649 = vrot.slane %v360, 2
        %v650 = vsel %vm625, %v647, %v649
        %v651 = vrot.slane %v361, 2
        %v652 = vrot.slane %v362, 2
        %v653 = vsel %vm625, %v651, %v652
        %v654 = vrot.slane %v363, 2
        %v655 = vsel %vm625, %v652, %v654
        %v656 = vrot.slane %v364, 2
        %v657 = vrot.slane %v365, 2
        %v658 = vsel %vm625, %v656, %v657
        %v659 = vrot.slane %v366, 2
        %v660 = vsel %vm625, %v657, %v659
        %v661 = vrot.slane %v367, 2
        %v662 = vrot.slane %v368, 2
        %v663 = vsel %vm625, %v661, %v662
        %v664 = vrot.slane %v369, 2
        %v665 = vsel %vm625, %v662, %v664
        %v666 = vrot.slane %v370, 2
        %v667 = vrot.slane %v371, 2
        %v668 = vsel %vm625, %v666, %v667
        %v669 = vrot.slane %v372, 2
        %v670 = vsel %vm625, %v667, %v669
        %v671 = vrot.slane %v373, 2
        %v672 = vrot.slane %v374, 2
        %v673 = vsel %vm625, %v671, %v672
        %v674 = vrot.slane %v375, 2
        %v675 = vsel %vm625, %v672, %v674
        %v676 = vrot.slane %v376, 2
        %v677 = vrot.slane %v377, 2
        %v678 = vsel %vm625, %v676, %v677
        %v679 = vrot.slane %v378, 2
        %v680 = vsel %vm625, %v677, %v679
        %v681 = vrot.slane %v379, 2
        %v682 = vrot.slane %v380, 2
        %v683 = vsel %vm625, %v681, %v682
        %v684 = vrot.slane %v381, 2
        %v685 = vsel %vm625, %v682, %v684
        %v686 = vrot.slane %v382, 2
        %v687 = vrot.slane %v383, 2
        %v688 = vsel %vm625, %v686, %v687
        %v689 = vrot.slane %v384, 2
        %v690 = vsel %vm625, %v687, %v689
        %v691 = vrot.slane %v385, 2
        %v692 = vrot.slane %v386, 2
        %v693 = vsel %vm625, %v691, %v692
        %v694 = vrot.slane %v387, 2
        %v695 = vsel %vm625, %v692, %v694
        %v696 = vrot.slane %v388, 2
        %v697 = vrot.slane %v389, 2
        %v698 = vsel %vm625, %v696, %v697
        %v699 = vrot.slane %v390, 2
        %v700 = vsel %vm625, %v697, %v699
        %v701 = vrot.slane %v391, 2
        %v702 = vrot.slane %v392, 2
        %v703 = vsel %vm625, %v701, %v702
        %v704 = vrot.slane %v393, 2
        %v705 = vsel %vm625, %v702, %v704
        %706 = vrot.lane.b32.xlu0 %v628, 8
        %v707 = vpop.permute.xlu0 %706
        %708 = vrot.lane.b32.xlu0 %v630, 8
        %v709 = vpop.permute.xlu0 %708
        %710 = vrot.lane.b32.xlu0 %v633, 8
        %v711 = vpop.permute.xlu0 %710
        %712 = vrot.lane.b32.xlu0 %v635, 8
        %v713 = vpop.permute.xlu0 %712
        %714 = vrot.lane.b32.xlu0 %v638, 8
        %v715 = vpop.permute.xlu0 %714
        %716 = vrot.lane.b32.xlu0 %v640, 8
        %v717 = vpop.permute.xlu0 %716
        %718 = vrot.lane.b32.xlu0 %v643, 8
        %v719 = vpop.permute.xlu0 %718
        %720 = vrot.lane.b32.xlu0 %v645, 8
        %v721 = vpop.permute.xlu0 %720
        %722 = vrot.lane.b32.xlu0 %v648, 8
        %v723 = vpop.permute.xlu0 %722
        %724 = vrot.lane.b32.xlu0 %v650, 8
        %v725 = vpop.permute.xlu0 %724
        %726 = vrot.lane.b32.xlu0 %v653, 8
        %v727 = vpop.permute.xlu0 %726
        %728 = vrot.lane.b32.xlu0 %v655, 8
        %v729 = vpop.permute.xlu0 %728
        %730 = vrot.lane.b32.xlu0 %v658, 8
        %v731 = vpop.permute.xlu0 %730
        %732 = vrot.lane.b32.xlu0 %v660, 8
        %v733 = vpop.permute.xlu0 %732
        %734 = vrot.lane.b32.xlu0 %v663, 8
        %v735 = vpop.permute.xlu0 %734
        %736 = vrot.lane.b32.xlu0 %v665, 8
        %v737 = vpop.permute.xlu0 %736
        %738 = vrot.lane.b32.xlu0 %v668, 8
        %v739 = vpop.permute.xlu0 %738
        %740 = vrot.lane.b32.xlu0 %v670, 8
        %v741 = vpop.permute.xlu0 %740
        %742 = vrot.lane.b32.xlu0 %v673, 8
        %v743 = vpop.permute.xlu0 %742
        %744 = vrot.lane.b32.xlu0 %v675, 8
        %v745 = vpop.permute.xlu0 %744
        %746 = vrot.lane.b32.xlu0 %v678, 8
        %v747 = vpop.permute.xlu0 %746
        %748 = vrot.lane.b32.xlu0 %v680, 8
        %v749 = vpop.permute.xlu0 %748
        %750 = vrot.lane.b32.xlu0 %v683, 8
        %v751 = vpop.permute.xlu0 %750
        %752 = vrot.lane.b32.xlu0 %v685, 8
        %v753 = vpop.permute.xlu0 %752
        %754 = vrot.lane.b32.xlu0 %v688, 8
        %v755 = vpop.permute.xlu0 %754
        %756 = vrot.lane.b32.xlu0 %v690, 8
        %v757 = vpop.permute.xlu0 %756
        %758 = vrot.lane.b32.xlu0 %v693, 8
        %v759 = vpop.permute.xlu0 %758
        %760 = vrot.lane.b32.xlu0 %v695, 8
        %v761 = vpop.permute.xlu0 %760
        %762 = vrot.lane.b32.xlu0 %v698, 8
        %v763 = vpop.permute.xlu0 %762
        %764 = vrot.lane.b32.xlu0 %v700, 8
        %v765 = vpop.permute.xlu0 %764
        %766 = vrot.lane.b32.xlu0 %v703, 8
        %v767 = vpop.permute.xlu0 %766
        %768 = vrot.lane.b32.xlu0 %v705, 8
        %v769 = vpop.permute.xlu0 %768
        %804 = vrot.lane.b32.xlu0 %v349, 12
        %v805 = vpop.permute.xlu0 %804
        %806 = vrot.lane.b32.xlu0 %v350, 12
        %v807 = vpop.permute.xlu0 %806
        %808 = vrot.lane.b32.xlu0 %v352, 12
        %v809 = vpop.permute.xlu0 %808
        %810 = vrot.lane.b32.xlu0 %v353, 12
        %v811 = vpop.permute.xlu0 %810
        %812 = vrot.lane.b32.xlu0 %v355, 12
        %v813 = vpop.permute.xlu0 %812
        %814 = vrot.lane.b32.xlu0 %v356, 12
        %v815 = vpop.permute.xlu0 %814
        %816 = vrot.lane.b32.xlu0 %v358, 12
        %v817 = vpop.permute.xlu0 %816
        %818 = vrot.lane.b32.xlu0 %v359, 12
        %v819 = vpop.permute.xlu0 %818
        %820 = vrot.lane.b32.xlu0 %v361, 12
        %v821 = vpop.permute.xlu0 %820
        %822 = vrot.lane.b32.xlu0 %v362, 12
        %v823 = vpop.permute.xlu0 %822
        %824 = vrot.lane.b32.xlu0 %v364, 12
        %v825 = vpop.permute.xlu0 %824
        %826 = vrot.lane.b32.xlu0 %v365, 12
        %v827 = vpop.permute.xlu0 %826
        %828 = vrot.lane.b32.xlu0 %v367, 12
        %v829 = vpop.permute.xlu0 %828
        %830 = vrot.lane.b32.xlu0 %v368, 12
        %v831 = vpop.permute.xlu0 %830
        %832 = vrot.lane.b32.xlu0 %v370, 12
        %v833 = vpop.permute.xlu0 %832
        %834 = vrot.lane.b32.xlu0 %v371, 12
        %v835 = vpop.permute.xlu0 %834
        %836 = vrot.lane.b32.xlu0 %v373, 12
        %v837 = vpop.permute.xlu0 %836
        %838 = vrot.lane.b32.xlu0 %v374, 12
        %v839 = vpop.permute.xlu0 %838
        %840 = vrot.lane.b32.xlu0 %v376, 12
        %v841 = vpop.permute.xlu0 %840
        %842 = vrot.lane.b32.xlu0 %v377, 12
        %v843 = vpop.permute.xlu0 %842
        %844 = vrot.lane.b32.xlu0 %v379, 12
        %v845 = vpop.permute.xlu0 %844
        %846 = vrot.lane.b32.xlu0 %v380, 12
        %v847 = vpop.permute.xlu0 %846
        %848 = vrot.lane.b32.xlu0 %v382, 12
        %v849 = vpop.permute.xlu0 %848
        %850 = vrot.lane.b32.xlu0 %v383, 12
        %v851 = vpop.permute.xlu0 %850
        %852 = vrot.lane.b32.xlu0 %v385, 12
        %v853 = vpop.permute.xlu0 %852
        %854 = vrot.lane.b32.xlu0 %v386, 12
        %v855 = vpop.permute.xlu0 %854
        %856 = vrot.lane.b32.xlu0 %v388, 12
        %v857 = vpop.permute.xlu0 %856
        %858 = vrot.lane.b32.xlu0 %v389, 12
        %v859 = vpop.permute.xlu0 %858
        %860 = vrot.lane.b32.xlu0 %v391, 12
        %v861 = vpop.permute.xlu0 %860
        %862 = vrot.lane.b32.xlu0 %v392, 12
        %v863 = vpop.permute.xlu0 %862
        %864 = vrot.lane.b32.xlu0 %v394, 12
        %v865 = vpop.permute.xlu0 %864
        %866 = vrot.lane.b32.xlu0 %v395, 12
        %v867 = vpop.permute.xlu0 %866
        %v901 = vrot.slane %v394, 1
        %v902 = vrot.slane %v395, 1
        %v903 = vsel %vm448, %v901, %v902
        %v904 = vrot.slane %v396, 1
        %v905 = vsel %vm448, %v902, %v904
        %906 = vrot.lane.b32.xlu0 %v456, 16
        %v907 = vpop.permute.xlu0 %906
        %908 = vrot.lane.b32.xlu0 %v458, 16
        %v909 = vpop.permute.xlu0 %908
        %910 = vrot.lane.b32.xlu0 %v461, 16
        %v911 = vpop.permute.xlu0 %910
        %912 = vrot.lane.b32.xlu0 %v463, 16
        %v913 = vpop.permute.xlu0 %912
        %914 = vrot.lane.b32.xlu0 %v466, 16
        %v915 = vpop.permute.xlu0 %914
        %916 = vrot.lane.b32.xlu0 %v468, 16
        %v917 = vpop.permute.xlu0 %916
        %918 = vrot.lane.b32.xlu0 %v471, 16
        %v919 = vpop.permute.xlu0 %918
        %920 = vrot.lane.b32.xlu0 %v473, 16
        %v921 = vpop.permute.xlu0 %920
        %922 = vrot.lane.b32.xlu0 %v476, 16
        %v923 = vpop.permute.xlu0 %922
        %924 = vrot.lane.b32.xlu0 %v478, 16
        %v925 = vpop.permute.xlu0 %924
        %926 = vrot.lane.b32.xlu0 %v481, 16
        %v927 = vpop.permute.xlu0 %926
        %928 = vrot.lane.b32.xlu0 %v483, 16
        %v929 = vpop.permute.xlu0 %928
        %930 = vrot.lane.b32.xlu0 %v486, 16
        %v931 = vpop.permute.xlu0 %930
        %932 = vrot.lane.b32.xlu0 %v488, 16
        %v933 = vpop.permute.xlu0 %932
        %934 = vrot.lane.b32.xlu0 %v491, 16
        %v935 = vpop.permute.xlu0 %934
        %936 = vrot.lane.b32.xlu0 %v493, 16
        %v937 = vpop.permute.xlu0 %936
        %938 = vrot.lane.b32.xlu0 %v496, 16
        %v939 = vpop.permute.xlu0 %938
        %940 = vrot.lane.b32.xlu0 %v498, 16
        %v941 = vpop.permute.xlu0 %940
        %942 = vrot.lane.b32.xlu0 %v501, 16
        %v943 = vpop.permute.xlu0 %942
        %944 = vrot.lane.b32.xlu0 %v503, 16
        %v945 = vpop.permute.xlu0 %944
        %946 = vrot.lane.b32.xlu0 %v506, 16
        %v947 = vpop.permute.xlu0 %946
        %948 = vrot.lane.b32.xlu0 %v508, 16
        %v949 = vpop.permute.xlu0 %948
        %950 = vrot.lane.b32.xlu0 %v511, 16
        %v951 = vpop.permute.xlu0 %950
        %952 = vrot.lane.b32.xlu0 %v513, 16
        %v953 = vpop.permute.xlu0 %952
        %954 = vrot.lane.b32.xlu0 %v516, 16
        %v955 = vpop.permute.xlu0 %954
        %956 = vrot.lane.b32.xlu0 %v518, 16
        %v957 = vpop.permute.xlu0 %956
        %958 = vrot.lane.b32.xlu0 %v521, 16
        %v959 = vpop.permute.xlu0 %958
        %960 = vrot.lane.b32.xlu0 %v523, 16
        %v961 = vpop.permute.xlu0 %960
        %962 = vrot.lane.b32.xlu0 %v526, 16
        %v963 = vpop.permute.xlu0 %962
        %964 = vrot.lane.b32.xlu0 %v528, 16
        %v965 = vpop.permute.xlu0 %964
        %966 = vrot.lane.b32.xlu0 %v903, 16
        %v967 = vpop.permute.xlu0 %966
        %968 = vrot.lane.b32.xlu0 %v905, 16
        %v969 = vpop.permute.xlu0 %968
        %v1002 = vrot.slane %v394, 2
        %v1003 = vrot.slane %v395, 2
        %v1004 = vsel %vm625, %v1002, %v1003
        %v1005 = vrot.slane %v396, 2
        %v1006 = vsel %vm625, %v1003, %v1005
        %1007 = vrot.lane.b32.xlu0 %v633, 20
        %v1008 = vpop.permute.xlu0 %1007
        %1009 = vrot.lane.b32.xlu0 %v635, 20
        %v1010 = vpop.permute.xlu0 %1009
        %1011 = vrot.lane.b32.xlu0 %v638, 20
        %v1012 = vpop.permute.xlu0 %1011
        %1013 = vrot.lane.b32.xlu0 %v640, 20
        %v1014 = vpop.permute.xlu0 %1013
        %1015 = vrot.lane.b32.xlu0 %v643, 20
        %v1016 = vpop.permute.xlu0 %1015
        %1017 = vrot.lane.b32.xlu0 %v645, 20
        %v1018 = vpop.permute.xlu0 %1017
        %1019 = vrot.lane.b32.xlu0 %v648, 20
        %v1020 = vpop.permute.xlu0 %1019
        %1021 = vrot.lane.b32.xlu0 %v650, 20
        %v1022 = vpop.permute.xlu0 %1021
        %1023 = vrot.lane.b32.xlu0 %v653, 20
        %v1024 = vpop.permute.xlu0 %1023
        %1025 = vrot.lane.b32.xlu0 %v655, 20
        %v1026 = vpop.permute.xlu0 %1025
        %1027 = vrot.lane.b32.xlu0 %v658, 20
        %v1028 = vpop.permute.xlu0 %1027
        %1029 = vrot.lane.b32.xlu0 %v660, 20
        %v1030 = vpop.permute.xlu0 %1029
        %1031 = vrot.lane.b32.xlu0 %v663, 20
        %v1032 = vpop.permute.xlu0 %1031
        %1033 = vrot.lane.b32.xlu0 %v665, 20
        %v1034 = vpop.permute.xlu0 %1033
        %1035 = vrot.lane.b32.xlu0 %v668, 20
        %v1036 = vpop.permute.xlu0 %1035
        %1037 = vrot.lane.b32.xlu0 %v670, 20
        %v1038 = vpop.permute.xlu0 %1037
        %1039 = vrot.lane.b32.xlu0 %v673, 20
        %v1040 = vpop.permute.xlu0 %1039
        %1041 = vrot.lane.b32.xlu0 %v675, 20
        %v1042 = vpop.permute.xlu0 %1041
        %1043 = vrot.lane.b32.xlu0 %v678, 20
        %v1044 = vpop.permute.xlu0 %1043
        %1045 = vrot.lane.b32.xlu0 %v680, 20
        %v1046 = vpop.permute.xlu0 %1045
        %1047 = vrot.lane.b32.xlu0 %v683, 20
        %v1048 = vpop.permute.xlu0 %1047
        %1049 = vrot.lane.b32.xlu0 %v685, 20
        %v1050 = vpop.permute.xlu0 %1049
        %1051 = vrot.lane.b32.xlu0 %v688, 20
        %v1052 = vpop.permute.xlu0 %1051
        %1053 = vrot.lane.b32.xlu0 %v690, 20
        %v1054 = vpop.permute.xlu0 %1053
        %1055 = vrot.lane.b32.xlu0 %v693, 20
        %v1056 = vpop.permute.xlu0 %1055
        %1057 = vrot.lane.b32.xlu0 %v695, 20
        %v1058 = vpop.permute.xlu0 %1057
        %1059 = vrot.lane.b32.xlu0 %v698, 20
        %v1060 = vpop.permute.xlu0 %1059
        %1061 = vrot.lane.b32.xlu0 %v700, 20
        %v1062 = vpop.permute.xlu0 %1061
        %1063 = vrot.lane.b32.xlu0 %v703, 20
        %v1064 = vpop.permute.xlu0 %1063
        %1065 = vrot.lane.b32.xlu0 %v705, 20
        %v1066 = vpop.permute.xlu0 %1065
        %1067 = vrot.lane.b32.xlu0 %v1004, 20
        %v1068 = vpop.permute.xlu0 %1067
        %1069 = vrot.lane.b32.xlu0 %v1006, 20
        %v1070 = vpop.permute.xlu0 %1069
        %1105 = vrot.lane.b32.xlu0 %v352, 24
        %v1106 = vpop.permute.xlu0 %1105
        %1107 = vrot.lane.b32.xlu0 %v353, 24
        %v1108 = vpop.permute.xlu0 %1107
        %1109 = vrot.lane.b32.xlu0 %v355, 24
        %v1110 = vpop.permute.xlu0 %1109
        %1111 = vrot.lane.b32.xlu0 %v356, 24
        %v1112 = vpop.permute.xlu0 %1111
        %1113 = vrot.lane.b32.xlu0 %v358, 24
        %v1114 = vpop.permute.xlu0 %1113
        %1115 = vrot.lane.b32.xlu0 %v359, 24
        %v1116 = vpop.permute.xlu0 %1115
        %1117 = vrot.lane.b32.xlu0 %v361, 24
        %v1118 = vpop.permute.xlu0 %1117
        %1119 = vrot.lane.b32.xlu0 %v362, 24
        %v1120 = vpop.permute.xlu0 %1119
        %1121 = vrot.lane.b32.xlu0 %v364, 24
        %v1122 = vpop.permute.xlu0 %1121
        %1123 = vrot.lane.b32.xlu0 %v365, 24
        %v1124 = vpop.permute.xlu0 %1123
        %1125 = vrot.lane.b32.xlu0 %v367, 24
        %v1126 = vpop.permute.xlu0 %1125
        %1127 = vrot.lane.b32.xlu0 %v368, 24
        %v1128 = vpop.permute.xlu0 %1127
        %1129 = vrot.lane.b32.xlu0 %v370, 24
        %v1130 = vpop.permute.xlu0 %1129
        %1131 = vrot.lane.b32.xlu0 %v371, 24
        %v1132 = vpop.permute.xlu0 %1131
        %1133 = vrot.lane.b32.xlu0 %v373, 24
        %v1134 = vpop.permute.xlu0 %1133
        %1135 = vrot.lane.b32.xlu0 %v374, 24
        %v1136 = vpop.permute.xlu0 %1135
        %1137 = vrot.lane.b32.xlu0 %v376, 24
        %v1138 = vpop.permute.xlu0 %1137
        %1139 = vrot.lane.b32.xlu0 %v377, 24
        %v1140 = vpop.permute.xlu0 %1139
        %1141 = vrot.lane.b32.xlu0 %v379, 24
        %v1142 = vpop.permute.xlu0 %1141
        %1143 = vrot.lane.b32.xlu0 %v380, 24
        %v1144 = vpop.permute.xlu0 %1143
        %1145 = vrot.lane.b32.xlu0 %v382, 24
        %v1146 = vpop.permute.xlu0 %1145
        %1147 = vrot.lane.b32.xlu0 %v383, 24
        %v1148 = vpop.permute.xlu0 %1147
        %1149 = vrot.lane.b32.xlu0 %v385, 24
        %v1150 = vpop.permute.xlu0 %1149
        %1151 = vrot.lane.b32.xlu0 %v386, 24
        %v1152 = vpop.permute.xlu0 %1151
        %1153 = vrot.lane.b32.xlu0 %v388, 24
        %v1154 = vpop.permute.xlu0 %1153
        %1155 = vrot.lane.b32.xlu0 %v389, 24
        %v1156 = vpop.permute.xlu0 %1155
        %1157 = vrot.lane.b32.xlu0 %v391, 24
        %v1158 = vpop.permute.xlu0 %1157
        %1159 = vrot.lane.b32.xlu0 %v392, 24
        %v1160 = vpop.permute.xlu0 %1159
        %1161 = vrot.lane.b32.xlu0 %v394, 24
        %v1162 = vpop.permute.xlu0 %1161
        %1163 = vrot.lane.b32.xlu0 %v395, 24
        %v1164 = vpop.permute.xlu0 %1163
        %1165 = vrot.lane.b32.xlu0 %v397, 24
        %v1166 = vpop.permute.xlu0 %1165
        %1167 = vrot.lane.b32.xlu0 %v398, 24
        %v1168 = vpop.permute.xlu0 %1167
        %v1202 = vrot.slane %v397, 1
        %v1203 = vrot.slane %v398, 1
        %v1204 = vsel %vm448, %v1202, %v1203
        %v1205 = vrot.slane %v399, 1
        %v1206 = vsel %vm448, %v1203, %v1205
        %1207 = vrot.lane.b32.xlu0 %v461, 28
        %v1208 = vpop.permute.xlu0 %1207
        %1209 = vrot.lane.b32.xlu0 %v463, 28
        %v1210 = vpop.permute.xlu0 %1209
        %1211 = vrot.lane.b32.xlu0 %v466, 28
        %v1212 = vpop.permute.xlu0 %1211
        %1213 = vrot.lane.b32.xlu0 %v468, 28
        %v1214 = vpop.permute.xlu0 %1213
        %1215 = vrot.lane.b32.xlu0 %v471, 28
        %v1216 = vpop.permute.xlu0 %1215
        %1217 = vrot.lane.b32.xlu0 %v473, 28
        %v1218 = vpop.permute.xlu0 %1217
        %1219 = vrot.lane.b32.xlu0 %v476, 28
        %v1220 = vpop.permute.xlu0 %1219
        %1221 = vrot.lane.b32.xlu0 %v478, 28
        %v1222 = vpop.permute.xlu0 %1221
        %1223 = vrot.lane.b32.xlu0 %v481, 28
        %v1224 = vpop.permute.xlu0 %1223
        %1225 = vrot.lane.b32.xlu0 %v483, 28
        %v1226 = vpop.permute.xlu0 %1225
        %1227 = vrot.lane.b32.xlu0 %v486, 28
        %v1228 = vpop.permute.xlu0 %1227
        %1229 = vrot.lane.b32.xlu0 %v488, 28
        %v1230 = vpop.permute.xlu0 %1229
        %1231 = vrot.lane.b32.xlu0 %v491, 28
        %v1232 = vpop.permute.xlu0 %1231
        %1233 = vrot.lane.b32.xlu0 %v493, 28
        %v1234 = vpop.permute.xlu0 %1233
        %1235 = vrot.lane.b32.xlu0 %v496, 28
        %v1236 = vpop.permute.xlu0 %1235
        %1237 = vrot.lane.b32.xlu0 %v498, 28
        %v1238 = vpop.permute.xlu0 %1237
        %1239 = vrot.lane.b32.xlu0 %v501, 28
        %v1240 = vpop.permute.xlu0 %1239
        %1241 = vrot.lane.b32.xlu0 %v503, 28
        %v1242 = vpop.permute.xlu0 %1241
        %1243 = vrot.lane.b32.xlu0 %v506, 28
        %v1244 = vpop.permute.xlu0 %1243
        %1245 = vrot.lane.b32.xlu0 %v508, 28
        %v1246 = vpop.permute.xlu0 %1245
        %1247 = vrot.lane.b32.xlu0 %v511, 28
        %v1248 = vpop.permute.xlu0 %1247
        %1249 = vrot.lane.b32.xlu0 %v513, 28
        %v1250 = vpop.permute.xlu0 %1249
        %1251 = vrot.lane.b32.xlu0 %v516, 28
        %v1252 = vpop.permute.xlu0 %1251
        %1253 = vrot.lane.b32.xlu0 %v518, 28
        %v1254 = vpop.permute.xlu0 %1253
        %1255 = vrot.lane.b32.xlu0 %v521, 28
        %v1256 = vpop.permute.xlu0 %1255
        %1257 = vrot.lane.b32.xlu0 %v523, 28
        %v1258 = vpop.permute.xlu0 %1257
        %1259 = vrot.lane.b32.xlu0 %v526, 28
        %v1260 = vpop.permute.xlu0 %1259
        %1261 = vrot.lane.b32.xlu0 %v528, 28
        %v1262 = vpop.permute.xlu0 %1261
        %1263 = vrot.lane.b32.xlu0 %v903, 28
        %v1264 = vpop.permute.xlu0 %1263
        %1265 = vrot.lane.b32.xlu0 %v905, 28
        %v1266 = vpop.permute.xlu0 %1265
        %1267 = vrot.lane.b32.xlu0 %v1204, 28
        %v1268 = vpop.permute.xlu0 %1267
        %1269 = vrot.lane.b32.xlu0 %v1206, 28
        %v1270 = vpop.permute.xlu0 %1269
        %v1303 = vrot.slane %v397, 2
        %v1304 = vrot.slane %v398, 2
        %v1305 = vsel %vm625, %v1303, %v1304
        %v1306 = vrot.slane %v399, 2
        %v1307 = vsel %vm625, %v1304, %v1306
        %1308 = vrot.lane.b32.xlu0 %v638, 32
        %v1309 = vpop.permute.xlu0 %1308
        %1310 = vrot.lane.b32.xlu0 %v640, 32
        %v1311 = vpop.permute.xlu0 %1310
        %1312 = vrot.lane.b32.xlu0 %v643, 32
        %v1313 = vpop.permute.xlu0 %1312
        %1314 = vrot.lane.b32.xlu0 %v645, 32
        %v1315 = vpop.permute.xlu0 %1314
        %1316 = vrot.lane.b32.xlu0 %v648, 32
        %v1317 = vpop.permute.xlu0 %1316
        %1318 = vrot.lane.b32.xlu0 %v650, 32
        %v1319 = vpop.permute.xlu0 %1318
        %1320 = vrot.lane.b32.xlu0 %v653, 32
        %v1321 = vpop.permute.xlu0 %1320
        %1322 = vrot.lane.b32.xlu0 %v655, 32
        %v1323 = vpop.permute.xlu0 %1322
        %1324 = vrot.lane.b32.xlu0 %v658, 32
        %v1325 = vpop.permute.xlu0 %1324
        %1326 = vrot.lane.b32.xlu0 %v660, 32
        %v1327 = vpop.permute.xlu0 %1326
        %1328 = vrot.lane.b32.xlu0 %v663, 32
        %v1329 = vpop.permute.xlu0 %1328
        %1330 = vrot.lane.b32.xlu0 %v665, 32
        %v1331 = vpop.permute.xlu0 %1330
        %1332 = vrot.lane.b32.xlu0 %v668, 32
        %v1333 = vpop.permute.xlu0 %1332
        %1334 = vrot.lane.b32.xlu0 %v670, 32
        %v1335 = vpop.permute.xlu0 %1334
        %1336 = vrot.lane.b32.xlu0 %v673, 32
        %v1337 = vpop.permute.xlu0 %1336
        %1338 = vrot.lane.b32.xlu0 %v675, 32
        %v1339 = vpop.permute.xlu0 %1338
        %1340 = vrot.lane.b32.xlu0 %v678, 32
        %v1341 = vpop.permute.xlu0 %1340
        %1342 = vrot.lane.b32.xlu0 %v680, 32
        %v1343 = vpop.permute.xlu0 %1342
        %1344 = vrot.lane.b32.xlu0 %v683, 32
        %v1345 = vpop.permute.xlu0 %1344
        %1346 = vrot.lane.b32.xlu0 %v685, 32
        %v1347 = vpop.permute.xlu0 %1346
        %1348 = vrot.lane.b32.xlu0 %v688, 32
        %v1349 = vpop.permute.xlu0 %1348
        %1350 = vrot.lane.b32.xlu0 %v690, 32
        %v1351 = vpop.permute.xlu0 %1350
        %1352 = vrot.lane.b32.xlu0 %v693, 32
        %v1353 = vpop.permute.xlu0 %1352
        %1354 = vrot.lane.b32.xlu0 %v695, 32
        %v1355 = vpop.permute.xlu0 %1354
        %1356 = vrot.lane.b32.xlu0 %v698, 32
        %v1357 = vpop.permute.xlu0 %1356
        %1358 = vrot.lane.b32.xlu0 %v700, 32
        %v1359 = vpop.permute.xlu0 %1358
        %1360 = vrot.lane.b32.xlu0 %v703, 32
        %v1361 = vpop.permute.xlu0 %1360
        %1362 = vrot.lane.b32.xlu0 %v705, 32
        %v1363 = vpop.permute.xlu0 %1362
        %1364 = vrot.lane.b32.xlu0 %v1004, 32
        %v1365 = vpop.permute.xlu0 %1364
        %1366 = vrot.lane.b32.xlu0 %v1006, 32
        %v1367 = vpop.permute.xlu0 %1366
        %1368 = vrot.lane.b32.xlu0 %v1305, 32
        %v1369 = vpop.permute.xlu0 %1368
        %1370 = vrot.lane.b32.xlu0 %v1307, 32
        %v1371 = vpop.permute.xlu0 %1370
        %vm1404 = vcmask 31744
        %v1405 = vsel %vm1404, %v346, %v530
        %v1406 = vsel %vm1404, %v347, %v532
        %v1407 = vsel %vm1404, %v349, %v534
        %v1408 = vsel %vm1404, %v350, %v536
        %v1409 = vsel %vm1404, %v352, %v538
        %v1410 = vsel %vm1404, %v353, %v540
        %v1411 = vsel %vm1404, %v355, %v542
        %v1412 = vsel %vm1404, %v356, %v544
        %v1413 = vsel %vm1404, %v358, %v546
        %v1414 = vsel %vm1404, %v359, %v548
        %v1415 = vsel %vm1404, %v361, %v550
        %v1416 = vsel %vm1404, %v362, %v552
        %v1417 = vsel %vm1404, %v364, %v554
        %v1418 = vsel %vm1404, %v365, %v556
        %v1419 = vsel %vm1404, %v367, %v558
        %v1420 = vsel %vm1404, %v368, %v560
        %v1421 = vsel %vm1404, %v370, %v562
        %v1422 = vsel %vm1404, %v371, %v564
        %v1423 = vsel %vm1404, %v373, %v566
        %v1424 = vsel %vm1404, %v374, %v568
        %v1425 = vsel %vm1404, %v376, %v570
        %v1426 = vsel %vm1404, %v377, %v572
        %v1427 = vsel %vm1404, %v379, %v574
        %v1428 = vsel %vm1404, %v380, %v576
        %v1429 = vsel %vm1404, %v382, %v578
        %v1430 = vsel %vm1404, %v383, %v580
        %v1431 = vsel %vm1404, %v385, %v582
        %v1432 = vsel %vm1404, %v386, %v584
        %v1433 = vsel %vm1404, %v388, %v586
        %v1434 = vsel %vm1404, %v389, %v588
        %v1435 = vsel %vm1404, %v391, %v590
        %v1436 = vsel %vm1404, %v392, %v592
        %vm1437 = vcmask 64512
        %v1438 = vsel %vm1437, %v1405, %v707
        %v1439 = vsel %vm1437, %v1406, %v709
        %v1440 = vsel %vm1437, %v1407, %v711
        %v1441 = vsel %vm1437, %v1408, %v713
        %v1442 = vsel %vm1437, %v1409, %v715
        %v1443 = vsel %vm1437, %v1410, %v717
        %v1444 = vsel %vm1437, %v1411, %v719
        %v1445 = vsel %vm1437, %v1412, %v721
        %v1446 = vsel %vm1437, %v1413, %v723
        %v1447 = vsel %vm1437, %v1414, %v725
        %v1448 = vsel %vm1437, %v1415, %v727
        %v1449 = vsel %vm1437, %v1416, %v729
        %v1450 = vsel %vm1437, %v1417, %v731
        %v1451 = vsel %vm1437, %v1418, %v733
        %v1452 = vsel %vm1437, %v1419, %v735
        %v1453 = vsel %vm1437, %v1420, %v737
        %v1454 = vsel %vm1437, %v1421, %v739
        %v1455 = vsel %vm1437, %v1422, %v741
        %v1456 = vsel %vm1437, %v1423, %v743
        %v1457 = vsel %vm1437, %v1424, %v745
        %v1458 = vsel %vm1437, %v1425, %v747
        %v1459 = vsel %vm1437, %v1426, %v749
        %v1460 = vsel %vm1437, %v1427, %v751
        %v1461 = vsel %vm1437, %v1428, %v753
        %v1462 = vsel %vm1437, %v1429, %v755
        %v1463 = vsel %vm1437, %v1430, %v757
        %v1464 = vsel %vm1437, %v1431, %v759
        %v1465 = vsel %vm1437, %v1432, %v761
        %v1466 = vsel %vm1437, %v1433, %v763
        %v1467 = vsel %vm1437, %v1434, %v765
        %v1468 = vsel %vm1437, %v1435, %v767
        %v1469 = vsel %vm1437, %v1436, %v769
        %vm1470 = vcmask 97280
        %v1471 = vsel %vm1470, %v1438, %v805
        %v1472 = vsel %vm1470, %v1439, %v807
        %v1473 = vsel %vm1470, %v1440, %v809
        %v1474 = vsel %vm1470, %v1441, %v811
        %v1475 = vsel %vm1470, %v1442, %v813
        %v1476 = vsel %vm1470, %v1443, %v815
        %v1477 = vsel %vm1470, %v1444, %v817
        %v1478 = vsel %vm1470, %v1445, %v819
        %v1479 = vsel %vm1470, %v1446, %v821
        %v1480 = vsel %vm1470, %v1447, %v823
        %v1481 = vsel %vm1470, %v1448, %v825
        %v1482 = vsel %vm1470, %v1449, %v827
        %v1483 = vsel %vm1470, %v1450, %v829
        %v1484 = vsel %vm1470, %v1451, %v831
        %v1485 = vsel %vm1470, %v1452, %v833
        %v1486 = vsel %vm1470, %v1453, %v835
        %v1487 = vsel %vm1470, %v1454, %v837
        %v1488 = vsel %vm1470, %v1455, %v839
        %v1489 = vsel %vm1470, %v1456, %v841
        %v1490 = vsel %vm1470, %v1457, %v843
        %v1491 = vsel %vm1470, %v1458, %v845
        %v1492 = vsel %vm1470, %v1459, %v847
        %v1493 = vsel %vm1470, %v1460, %v849
        %v1494 = vsel %vm1470, %v1461, %v851
        %v1495 = vsel %vm1470, %v1462, %v853
        %v1496 = vsel %vm1470, %v1463, %v855
        %v1497 = vsel %vm1470, %v1464, %v857
        %v1498 = vsel %vm1470, %v1465, %v859
        %v1499 = vsel %vm1470, %v1466, %v861
        %v1500 = vsel %vm1470, %v1467, %v863
        %v1501 = vsel %vm1470, %v1468, %v865
        %v1502 = vsel %vm1470, %v1469, %v867
        %vm1503 = vcmask 130048
        %v1504 = vsel %vm1503, %v1471, %v907
        %v1505 = vsel %vm1503, %v1472, %v909
        %v1506 = vsel %vm1503, %v1473, %v911
        %v1507 = vsel %vm1503, %v1474, %v913
        %v1508 = vsel %vm1503, %v1475, %v915
        %v1509 = vsel %vm1503, %v1476, %v917
        %v1510 = vsel %vm1503, %v1477, %v919
        %v1511 = vsel %vm1503, %v1478, %v921
        %v1512 = vsel %vm1503, %v1479, %v923
        %v1513 = vsel %vm1503, %v1480, %v925
        %v1514 = vsel %vm1503, %v1481, %v927
        %v1515 = vsel %vm1503, %v1482, %v929
        %v1516 = vsel %vm1503, %v1483, %v931
        %v1517 = vsel %vm1503, %v1484, %v933
        %v1518 = vsel %vm1503, %v1485, %v935
        %v1519 = vsel %vm1503, %v1486, %v937
        %v1520 = vsel %vm1503, %v1487, %v939
        %v1521 = vsel %vm1503, %v1488, %v941
        %v1522 = vsel %vm1503, %v1489, %v943
        %v1523 = vsel %vm1503, %v1490, %v945
        %v1524 = vsel %vm1503, %v1491, %v947
        %v1525 = vsel %vm1503, %v1492, %v949
        %v1526 = vsel %vm1503, %v1493, %v951
        %v1527 = vsel %vm1503, %v1494, %v953
        %v1528 = vsel %vm1503, %v1495, %v955
        %v1529 = vsel %vm1503, %v1496, %v957
        %v1530 = vsel %vm1503, %v1497, %v959
        %v1531 = vsel %vm1503, %v1498, %v961
        %v1532 = vsel %vm1503, %v1499, %v963
        %v1533 = vsel %vm1503, %v1500, %v965
        %v1534 = vsel %vm1503, %v1501, %v967
        %v1535 = vsel %vm1503, %v1502, %v969
        %vm1536 = vcmask 162816
        %v1537 = vsel %vm1536, %v1504, %v1008
        %v1538 = vsel %vm1536, %v1505, %v1010
        %v1539 = vsel %vm1536, %v1506, %v1012
        %v1540 = vsel %vm1536, %v1507, %v1014
        %v1541 = vsel %vm1536, %v1508, %v1016
        %v1542 = vsel %vm1536, %v1509, %v1018
        %v1543 = vsel %vm1536, %v1510, %v1020
        %v1544 = vsel %vm1536, %v1511, %v1022
        %v1545 = vsel %vm1536, %v1512, %v1024
        %v1546 = vsel %vm1536, %v1513, %v1026
        %v1547 = vsel %vm1536, %v1514, %v1028
        %v1548 = vsel %vm1536, %v1515, %v1030
        %v1549 = vsel %vm1536, %v1516, %v1032
        %v1550 = vsel %vm1536, %v1517, %v1034
        %v1551 = vsel %vm1536, %v1518, %v1036
        %v1552 = vsel %vm1536, %v1519, %v1038
        %v1553 = vsel %vm1536, %v1520, %v1040
        %v1554 = vsel %vm1536, %v1521, %v1042
        %v1555 = vsel %vm1536, %v1522, %v1044
        %v1556 = vsel %vm1536, %v1523, %v1046
        %v1557 = vsel %vm1536, %v1524, %v1048
        %v1558 = vsel %vm1536, %v1525, %v1050
        %v1559 = vsel %vm1536, %v1526, %v1052
        %v1560 = vsel %vm1536, %v1527, %v1054
        %v1561 = vsel %vm1536, %v1528, %v1056
        %v1562 = vsel %vm1536, %v1529, %v1058
        %v1563 = vsel %vm1536, %v1530, %v1060
        %v1564 = vsel %vm1536, %v1531, %v1062
        %v1565 = vsel %vm1536, %v1532, %v1064
        %v1566 = vsel %vm1536, %v1533, %v1066
        %v1567 = vsel %vm1536, %v1534, %v1068
        %v1568 = vsel %vm1536, %v1535, %v1070
        %vm1569 = vcmask 195584
        %v1570 = vsel %vm1569, %v1537, %v1106
        %v1571 = vsel %vm1569, %v1538, %v1108
        %v1572 = vsel %vm1569, %v1539, %v1110
        %v1573 = vsel %vm1569, %v1540, %v1112
        %v1574 = vsel %vm1569, %v1541, %v1114
        %v1575 = vsel %vm1569, %v1542, %v1116
        %v1576 = vsel %vm1569, %v1543, %v1118
        %v1577 = vsel %vm1569, %v1544, %v1120
        %v1578 = vsel %vm1569, %v1545, %v1122
        %v1579 = vsel %vm1569, %v1546, %v1124
        %v1580 = vsel %vm1569, %v1547, %v1126
        %v1581 = vsel %vm1569, %v1548, %v1128
        %v1582 = vsel %vm1569, %v1549, %v1130
        %v1583 = vsel %vm1569, %v1550, %v1132
        %v1584 = vsel %vm1569, %v1551, %v1134
        %v1585 = vsel %vm1569, %v1552, %v1136
        %v1586 = vsel %vm1569, %v1553, %v1138
        %v1587 = vsel %vm1569, %v1554, %v1140
        %v1588 = vsel %vm1569, %v1555, %v1142
        %v1589 = vsel %vm1569, %v1556, %v1144
        %v1590 = vsel %vm1569, %v1557, %v1146
        %v1591 = vsel %vm1569, %v1558, %v1148
        %v1592 = vsel %vm1569, %v1559, %v1150
        %v1593 = vsel %vm1569, %v1560, %v1152
        %v1594 = vsel %vm1569, %v1561, %v1154
        %v1595 = vsel %vm1569, %v1562, %v1156
        %v1596 = vsel %vm1569, %v1563, %v1158
        %v1597 = vsel %vm1569, %v1564, %v1160
        %v1598 = vsel %vm1569, %v1565, %v1162
        %v1599 = vsel %vm1569, %v1566, %v1164
        %v1600 = vsel %vm1569, %v1567, %v1166
        %v1601 = vsel %vm1569, %v1568, %v1168
        %vm1602 = vcmask 228352
        %v1603 = vsel %vm1602, %v1570, %v1208
        %v1604 = vsel %vm1602, %v1571, %v1210
        %v1605 = vsel %vm1602, %v1572, %v1212
        %v1606 = vsel %vm1602, %v1573, %v1214
        %v1607 = vsel %vm1602, %v1574, %v1216
        %v1608 = vsel %vm1602, %v1575, %v1218
        %v1609 = vsel %vm1602, %v1576, %v1220
        %v1610 = vsel %vm1602, %v1577, %v1222
        %v1611 = vsel %vm1602, %v1578, %v1224
        %v1612 = vsel %vm1602, %v1579, %v1226
        %v1613 = vsel %vm1602, %v1580, %v1228
        %v1614 = vsel %vm1602, %v1581, %v1230
        %v1615 = vsel %vm1602, %v1582, %v1232
        %v1616 = vsel %vm1602, %v1583, %v1234
        %v1617 = vsel %vm1602, %v1584, %v1236
        %v1618 = vsel %vm1602, %v1585, %v1238
        %v1619 = vsel %vm1602, %v1586, %v1240
        %v1620 = vsel %vm1602, %v1587, %v1242
        %v1621 = vsel %vm1602, %v1588, %v1244
        %v1622 = vsel %vm1602, %v1589, %v1246
        %v1623 = vsel %vm1602, %v1590, %v1248
        %v1624 = vsel %vm1602, %v1591, %v1250
        %v1625 = vsel %vm1602, %v1592, %v1252
        %v1626 = vsel %vm1602, %v1593, %v1254
        %v1627 = vsel %vm1602, %v1594, %v1256
        %v1628 = vsel %vm1602, %v1595, %v1258
        %v1629 = vsel %vm1602, %v1596, %v1260
        %v1630 = vsel %vm1602, %v1597, %v1262
        %v1631 = vsel %vm1602, %v1598, %v1264
        %v1632 = vsel %vm1602, %v1599, %v1266
        %v1633 = vsel %vm1602, %v1600, %v1268
        %v1634 = vsel %vm1602, %v1601, %v1270
        %vm1635 = vcmask 261120
        %v1636 = vsel %vm1635, %v1603, %v1309
        %v1637 = vsel %vm1635, %v1604, %v1311
        %v1638 = vsel %vm1635, %v1605, %v1313
        %v1639 = vsel %vm1635, %v1606, %v1315
        %v1640 = vsel %vm1635, %v1607, %v1317
        %v1641 = vsel %vm1635, %v1608, %v1319
        %v1642 = vsel %vm1635, %v1609, %v1321
        %v1643 = vsel %vm1635, %v1610, %v1323
        %v1644 = vsel %vm1635, %v1611, %v1325
        %v1645 = vsel %vm1635, %v1612, %v1327
        %v1646 = vsel %vm1635, %v1613, %v1329
        %v1647 = vsel %vm1635, %v1614, %v1331
        %v1648 = vsel %vm1635, %v1615, %v1333
        %v1649 = vsel %vm1635, %v1616, %v1335
        %v1650 = vsel %vm1635, %v1617, %v1337
        %v1651 = vsel %vm1635, %v1618, %v1339
        %v1652 = vsel %vm1635, %v1619, %v1341
        %v1653 = vsel %vm1635, %v1620, %v1343
        %v1654 = vsel %vm1635, %v1621, %v1345
        %v1655 = vsel %vm1635, %v1622, %v1347
        %v1656 = vsel %vm1635, %v1623, %v1349
        %v1657 = vsel %vm1635, %v1624, %v1351
        %v1658 = vsel %vm1635, %v1625, %v1353
        %v1659 = vsel %vm1635, %v1626, %v1355
        %v1660 = vsel %vm1635, %v1627, %v1357
        %v1661 = vsel %vm1635, %v1628, %v1359
        %v1662 = vsel %vm1635, %v1629, %v1361
        %v1663 = vsel %vm1635, %v1630, %v1363
        %v1664 = vsel %vm1635, %v1631, %v1365
        %v1665 = vsel %vm1635, %v1632, %v1367
        %v1666 = vsel %vm1635, %v1633, %v1369
        %v1667 = vsel %vm1635, %v1634, %v1371
        %v1668 = vld [vmem:[%s1] sm:$0xff]
        %v1669 = vld [vmem:[%s1 + $0x8] sm:$0xff]
        %v1670 = vld [vmem:[%s1 + $0x10] sm:$0xff]
        %v1671 = vld [vmem:[%s1 + $0x18] sm:$0xff]
        %v1672 = vld [vmem:[%s1 + $0x20] sm:$0xf]
        %v1673 = vld [vmem:[%s2] sm:$0x1]
        %v1675 = vlaneseq
        %v1676 = vshrl.u32 %v1675, 7
        %v1677 = vsub.s32 0, %v1676
        %v1678 = vrot.slane %v1673, %v1677
        %vm1680 = vcmask 293888
        %v1682 = vsel %vm1680, %v1636, 0
        %v1685 = vsel %vm1680, %v1637, 0
        %v1688 = vsel %vm1680, %v1638, 0
        %v1691 = vsel %vm1680, %v1639, 0
        %v1694 = vsel %vm1680, %v1640, 0
        %v1697 = vsel %vm1680, %v1641, 0
        %v1700 = vsel %vm1680, %v1642, 0
        %v1703 = vsel %vm1680, %v1643, 0
        %v1706 = vsel %vm1680, %v1644, 0
        %v1709 = vsel %vm1680, %v1645, 0
        %v1712 = vsel %vm1680, %v1646, 0
        %v1715 = vsel %vm1680, %v1647, 0
        %v1718 = vsel %vm1680, %v1648, 0
        %v1721 = vsel %vm1680, %v1649, 0
        %v1724 = vsel %vm1680, %v1650, 0
        %v1727 = vsel %vm1680, %v1651, 0
        %v1730 = vsel %vm1680, %v1652, 0
        %v1733 = vsel %vm1680, %v1653, 0
        %v1736 = vsel %vm1680, %v1654, 0
        %v1739 = vsel %vm1680, %v1655, 0
        %v1742 = vsel %vm1680, %v1656, 0
        %v1745 = vsel %vm1680, %v1657, 0
        %v1748 = vsel %vm1680, %v1658, 0
        %v1751 = vsel %vm1680, %v1659, 0
        %v1754 = vsel %vm1680, %v1660, 0
        %v1757 = vsel %vm1680, %v1661, 0
        %v1760 = vsel %vm1680, %v1662, 0
        %v1763 = vsel %vm1680, %v1663, 0
        %v1766 = vsel %vm1680, %v1664, 0
        %v1769 = vsel %vm1680, %v1665, 0
        %v1772 = vsel %vm1680, %v1666, 0
        %v1775 = vsel %vm1680, %v1667, 0
        %vm1777 = vcmask 1043456
        %v1779 = vsel %vm1777, %v1672, 0
        %1781 = vmatprep.subr.mxu0 0.0
        %1782 = vmatpush1.msra.mxu0 0.0
        %1783 = vmatprep.subr.mxu0 0.0
        %1784 = vmatpush1.msra.mxu0 0.0
        %1785 = vmatprep.subr.mxu0 0.0
        %1786 = vmatpush1.msra.mxu0 0.0
        %1787 = vmatprep.subr.mxu0 0.0
        %1788 = vmatpush1.msra.mxu0 0.0
        %1789 = vmatprep.subr.mxu0 0.0
        %1790 = vmatpush1.msra.mxu0 0.0
        %1791 = vmatprep.subr.mxu0 0.0
        %1792 = vmatpush1.msra.mxu0 0.0
        %1793 = vmatprep.subr.mxu0 0.0
        %1794 = vmatpush1.msra.mxu0 0.0
        %1795 = vmatprep.subr.mxu0 0.0
        %1796 = vmatpush1.msra.mxu0 0.0
        %1797 = vmatprep.subr.mxu0 0.0
        %1798 = vmatpush1.msra.mxu0 0.0
        %1799 = vmatprep.subr.mxu0 0.0
        %1800 = vmatpush1.msra.mxu0 0.0
        %1801 = vmatprep.subr.mxu0 0.0
        %1802 = vmatpush1.msra.mxu0 0.0
        %1803 = vmatprep.subr.mxu0 0.0
        %1804 = vmatpush1.msra.mxu0 %v1779
        %1805 = vmatprep.subr.mxu0 0.0
        %1806 = vmatpush1.msra.mxu0 %v1671
        %1807 = vmatprep.subr.mxu0 0.0
        %1808 = vmatpush1.msra.mxu0 %v1670
        %1809 = vmatprep.subr.mxu0 0.0
        %1810 = vmatpush1.msra.mxu0 %v1669
        %1811 = vmatprep.subr.mxu0 0.0
        %1812 = vmatpush1.msra.mxu0 %v1668
        %1813 = vmatprep.subr.mxu0 0.0
        %1814 = vmatpush2.msra.mxu0 0.0
        %1815 = vmatprep.subr.mxu0 0.0
        %1816 = vmatpush2.msra.mxu0 0.0
        %1817 = vmatprep.subr.mxu0 0.0
        %1818 = vmatpush2.msra.mxu0 0.0
        %1819 = vmatprep.subr.mxu0 0.0
        %1820 = vmatpush2.msra.mxu0 0.0
        %1821 = vmatprep.subr.mxu0 0.0
        %1822 = vmatpush2.msra.mxu0 0.0
        %1823 = vmatprep.subr.mxu0 0.0
        %1824 = vmatpush2.msra.mxu0 0.0
        %1825 = vmatprep.subr.mxu0 0.0
        %1826 = vmatpush2.msra.mxu0 0.0
        %1827 = vmatprep.subr.mxu0 0.0
        %1828 = vmatpush2.msra.mxu0 0.0
        %1829 = vmatprep.subr.mxu0 0.0
        %1830 = vmatpush2.msra.mxu0 0.0
        %1831 = vmatprep.subr.mxu0 0.0
        %1832 = vmatpush2.msra.mxu0 0.0
        %1833 = vmatprep.subr.mxu0 0.0
        %1834 = vmatpush2.msra.mxu0 0.0
        %1835 = vmatprep.subr.mxu0 0.0
        %1836 = vmatpush2.msra.mxu0 0.0
        %1837 = vmatprep.subr.mxu0 0.0
        %1838 = vmatpush2.msra.mxu0 0.0
        %1839 = vmatprep.subr.mxu0 0.0
        %1840 = vmatpush2.msra.mxu0 0.0
        %1841 = vmatprep.subr.mxu0 0.0
        %1842 = vmatpush2.msra.mxu0 0.0
        %1843 = vmatprep.subr.mxu0 0.0
        %1844 = vmatpush2.msra.mxu0 0.0
        %1845 = vmatprep.mubr.f32.mxu0 0.0
        %1846 = vmatmul.mubr.f32.gmra.mxu0 %v1682
        %v1847 = vpop.f32.mrf.mxu0
        %v1848 = vadd.f32 %v1678, %v1847
        %v1849 = vpop.f32.mrf.mxu0
        %1850 = vmatprep.mubr.f32.mxu0 0.0
        %1851 = vmatmul.mubr.f32.gmra.mxu0 %v1685
        %v1852 = vpop.f32.mrf.mxu0
        %v1853 = vadd.f32 %v1678, %v1852
        %v1854 = vpop.f32.mrf.mxu0
        %1855 = vmatprep.mubr.f32.mxu0 0.0
        %1856 = vmatmul.mubr.f32.gmra.mxu0 %v1688
        %v1857 = vpop.f32.mrf.mxu0
        %v1858 = vadd.f32 %v1678, %v1857
        %v1859 = vpop.f32.mrf.mxu0
        %1860 = vmatprep.mubr.f32.mxu0 0.0
        %1861 = vmatmul.mubr.f32.gmra.mxu0 %v1691
        %v1862 = vpop.f32.mrf.mxu0
        %v1863 = vadd.f32 %v1678, %v1862
        %v1864 = vpop.f32.mrf.mxu0
        %1865 = vmatprep.mubr.f32.mxu0 0.0
        %1866 = vmatmul.mubr.f32.gmra.mxu0 %v1694
        %v1867 = vpop.f32.mrf.mxu0
        %v1868 = vadd.f32 %v1678, %v1867
        %v1869 = vpop.f32.mrf.mxu0
        %1870 = vmatprep.mubr.f32.mxu0 0.0
        %1871 = vmatmul.mubr.f32.gmra.mxu0 %v1697
        %v1872 = vpop.f32.mrf.mxu0
        %v1873 = vadd.f32 %v1678, %v1872
        %v1874 = vpop.f32.mrf.mxu0
        %1875 = vmatprep.mubr.f32.mxu0 0.0
        %1876 = vmatmul.mubr.f32.gmra.mxu0 %v1700
        %v1877 = vpop.f32.mrf.mxu0
        %v1878 = vadd.f32 %v1678, %v1877
        %v1879 = vpop.f32.mrf.mxu0
        %1880 = vmatprep.mubr.f32.mxu0 0.0
        %1881 = vmatmul.mubr.f32.gmra.mxu0 %v1703
        %v1882 = vpop.f32.mrf.mxu0
        %v1883 = vadd.f32 %v1678, %v1882
        %v1884 = vpop.f32.mrf.mxu0
        %1885 = vmatprep.mubr.f32.mxu0 0.0
        %1886 = vmatmul.mubr.f32.gmra.mxu0 %v1706
        %v1887 = vpop.f32.mrf.mxu0
        %v1888 = vadd.f32 %v1678, %v1887
        %v1889 = vpop.f32.mrf.mxu0
        %1890 = vmatprep.mubr.f32.mxu0 0.0
        %1891 = vmatmul.mubr.f32.gmra.mxu0 %v1709
        %v1892 = vpop.f32.mrf.mxu0
        %v1893 = vadd.f32 %v1678, %v1892
        %v1894 = vpop.f32.mrf.mxu0
        %1895 = vmatprep.mubr.f32.mxu0 0.0
        %1896 = vmatmul.mubr.f32.gmra.mxu0 %v1712
        %v1897 = vpop.f32.mrf.mxu0
        %v1898 = vadd.f32 %v1678, %v1897
        %v1899 = vpop.f32.mrf.mxu0
        %1900 = vmatprep.mubr.f32.mxu0 0.0
        %1901 = vmatmul.mubr.f32.gmra.mxu0 %v1715
        %v1902 = vpop.f32.mrf.mxu0
        %v1903 = vadd.f32 %v1678, %v1902
        %v1904 = vpop.f32.mrf.mxu0
        %1905 = vmatprep.mubr.f32.mxu0 0.0
        %1906 = vmatmul.mubr.f32.gmra.mxu0 %v1718
        %v1907 = vpop.f32.mrf.mxu0
        %v1908 = vadd.f32 %v1678, %v1907
        %v1909 = vpop.f32.mrf.mxu0
        %1910 = vmatprep.mubr.f32.mxu0 0.0
        %1911 = vmatmul.mubr.f32.gmra.mxu0 %v1721
        %v1912 = vpop.f32.mrf.mxu0
        %v1913 = vadd.f32 %v1678, %v1912
        %v1914 = vpop.f32.mrf.mxu0
        %1915 = vmatprep.mubr.f32.mxu0 0.0
        %1916 = vmatmul.mubr.f32.gmra.mxu0 %v1724
        %v1917 = vpop.f32.mrf.mxu0
        %v1918 = vadd.f32 %v1678, %v1917
        %v1919 = vpop.f32.mrf.mxu0
        %1920 = vmatprep.mubr.f32.mxu0 0.0
        %1921 = vmatmul.mubr.f32.gmra.mxu0 %v1727
        %v1922 = vpop.f32.mrf.mxu0
        %v1923 = vadd.f32 %v1678, %v1922
        %v1924 = vpop.f32.mrf.mxu0
        %1925 = vmatprep.mubr.f32.mxu0 0.0
        %1926 = vmatmul.mubr.f32.gmra.mxu0 %v1730
        %v1927 = vpop.f32.mrf.mxu0
        %v1928 = vadd.f32 %v1678, %v1927
        %v1929 = vpop.f32.mrf.mxu0
        %1930 = vmatprep.mubr.f32.mxu0 0.0
        %1931 = vmatmul.mubr.f32.gmra.mxu0 %v1733
        %v1932 = vpop.f32.mrf.mxu0
        %v1933 = vadd.f32 %v1678, %v1932
        %v1934 = vpop.f32.mrf.mxu0
        %1935 = vmatprep.mubr.f32.mxu0 0.0
        %1936 = vmatmul.mubr.f32.gmra.mxu0 %v1736
        %v1937 = vpop.f32.mrf.mxu0
        %v1938 = vadd.f32 %v1678, %v1937
        %v1939 = vpop.f32.mrf.mxu0
        %1940 = vmatprep.mubr.f32.mxu0 0.0
        %1941 = vmatmul.mubr.f32.gmra.mxu0 %v1739
        %v1942 = vpop.f32.mrf.mxu0
        %v1943 = vadd.f32 %v1678, %v1942
        %v1944 = vpop.f32.mrf.mxu0
        %1945 = vmatprep.mubr.f32.mxu0 0.0
        %1946 = vmatmul.mubr.f32.gmra.mxu0 %v1742
        %v1947 = vpop.f32.mrf.mxu0
        %v1948 = vadd.f32 %v1678, %v1947
        %v1949 = vpop.f32.mrf.mxu0
        %1950 = vmatprep.mubr.f32.mxu0 0.0
        %1951 = vmatmul.mubr.f32.gmra.mxu0 %v1745
        %v1952 = vpop.f32.mrf.mxu0
        %v1953 = vadd.f32 %v1678, %v1952
        %v1954 = vpop.f32.mrf.mxu0
        %1955 = vmatprep.mubr.f32.mxu0 0.0
        %1956 = vmatmul.mubr.f32.gmra.mxu0 %v1748
        %v1957 = vpop.f32.mrf.mxu0
        %v1958 = vadd.f32 %v1678, %v1957
        %v1959 = vpop.f32.mrf.mxu0
        %1960 = vmatprep.mubr.f32.mxu0 0.0
        %1961 = vmatmul.mubr.f32.gmra.mxu0 %v1751
        %v1962 = vpop.f32.mrf.mxu0
        %v1963 = vadd.f32 %v1678, %v1962
        %v1964 = vpop.f32.mrf.mxu0
        %1965 = vmatprep.mubr.f32.mxu0 0.0
        %1966 = vmatmul.mubr.f32.gmra.mxu0 %v1754
        %v1967 = vpop.f32.mrf.mxu0
        %v1968 = vadd.f32 %v1678, %v1967
        %v1969 = vpop.f32.mrf.mxu0
        %1970 = vmatprep.mubr.f32.mxu0 0.0
        %1971 = vmatmul.mubr.f32.gmra.mxu0 %v1757
        %v1972 = vpop.f32.mrf.mxu0
        %v1973 = vadd.f32 %v1678, %v1972
        %v1974 = vpop.f32.mrf.mxu0
        %1975 = vmatprep.mubr.f32.mxu0 0.0
        %1976 = vmatmul.mubr.f32.gmra.mxu0 %v1760
        %v1977 = vpop.f32.mrf.mxu0
        %v1978 = vadd.f32 %v1678, %v1977
        %v1979 = vpop.f32.mrf.mxu0
        %1980 = vmatprep.mubr.f32.mxu0 0.0
        %1981 = vmatmul.mubr.f32.gmra.mxu0 %v1763
        %v1982 = vpop.f32.mrf.mxu0
        %v1983 = vadd.f32 %v1678, %v1982
        %v1984 = vpop.f32.mrf.mxu0
        %1985 = vmatprep.mubr.f32.mxu0 0.0
        %1986 = vmatmul.mubr.f32.gmra.mxu0 %v1766
        %v1987 = vpop.f32.mrf.mxu0
        %v1988 = vadd.f32 %v1678, %v1987
        %v1989 = vpop.f32.mrf.mxu0
        %1990 = vmatprep.mubr.f32.mxu0 0.0
        %1991 = vmatmul.mubr.f32.gmra.mxu0 %v1769
        %v1992 = vpop.f32.mrf.mxu0
        %v1993 = vadd.f32 %v1678, %v1992
        %v1994 = vpop.f32.mrf.mxu0
        %1995 = vmatprep.mubr.f32.mxu0 0.0
        %1996 = vmatmul.mubr.f32.gmra.mxu0 %v1772
        %v1997 = vpop.f32.mrf.mxu0
        %v1998 = vadd.f32 %v1678, %v1997
        %v1999 = vpop.f32.mrf.mxu0
        %2000 = vmatprep.mubr.f32.mxu0 0.0
        %2001 = vmatmul.mubr.f32.gmra.mxu0 %v1775
        %v2002 = vpop.f32.mrf.mxu0
        %v2003 = vadd.f32 %v1678, %v2002
        %v2004 = vpop.f32.mrf.mxu0
        %2005 = vdwg.mxu0
        %v2006 = vmax.f32 %v1848, 0.0
        %v2007 = vmax.f32 %v1853, 0.0
        %v2008 = vmax.f32 %v1858, 0.0
        %v2009 = vmax.f32 %v1863, 0.0
        %v2010 = vmax.f32 %v1868, 0.0
        %v2011 = vmax.f32 %v1873, 0.0
        %v2012 = vmax.f32 %v1878, 0.0
        %v2013 = vmax.f32 %v1883, 0.0
        %v2014 = vmax.f32 %v1888, 0.0
        %v2015 = vmax.f32 %v1893, 0.0
        %v2016 = vmax.f32 %v1898, 0.0
        %v2017 = vmax.f32 %v1903, 0.0
        %v2018 = vmax.f32 %v1908, 0.0
        %v2019 = vmax.f32 %v1913, 0.0
        %v2020 = vmax.f32 %v1918, 0.0
        %v2021 = vmax.f32 %v1923, 0.0
        %v2022 = vmax.f32 %v1928, 0.0
        %v2023 = vmax.f32 %v1933, 0.0
        %v2024 = vmax.f32 %v1938, 0.0
        %v2025 = vmax.f32 %v1943, 0.0
        %v2026 = vmax.f32 %v1948, 0.0
        %v2027 = vmax.f32 %v1953, 0.0
        %v2028 = vmax.f32 %v1958, 0.0
        %v2029 = vmax.f32 %v1963, 0.0
        %v2030 = vmax.f32 %v1968, 0.0
        %v2031 = vmax.f32 %v1973, 0.0
        %v2032 = vmax.f32 %v1978, 0.0
        %v2033 = vmax.f32 %v1983, 0.0
        %v2034 = vmax.f32 %v1988, 0.0
        %v2035 = vmax.f32 %v1993, 0.0
        %v2036 = vmax.f32 %v1998, 0.0
        %v2037 = vmax.f32 %v2003, 0.0
        %2038 = vmatprep.subr.mxu0 0.0
        %2039 = vmatpush1.msra.mxu0 %v2021
        %2040 = vmatprep.subr.mxu0 0.0
        %2041 = vmatpush1.msra.mxu0 %v2020
        %2042 = vmatprep.subr.mxu0 0.0
        %2043 = vmatpush1.msra.mxu0 %v2019
        %2044 = vmatprep.subr.mxu0 0.0
        %2045 = vmatpush1.msra.mxu0 %v2018
        %2046 = vmatprep.subr.mxu0 0.0
        %2047 = vmatpush1.msra.mxu0 %v2017
        %2048 = vmatprep.subr.mxu0 0.0
        %2049 = vmatpush1.msra.mxu0 %v2016
        %2050 = vmatprep.subr.mxu0 0.0
        %2051 = vmatpush1.msra.mxu0 %v2015
        %2052 = vmatprep.subr.mxu0 0.0
        %2053 = vmatpush1.msra.mxu0 %v2014
        %2054 = vmatprep.subr.mxu0 0.0
        %2055 = vmatpush1.msra.mxu0 %v2013
        %2056 = vmatprep.subr.mxu0 0.0
        %2057 = vmatpush1.msra.mxu0 %v2012
        %2058 = vmatprep.subr.mxu0 0.0
        %2059 = vmatpush1.msra.mxu0 %v2011
        %2060 = vmatprep.subr.mxu0 0.0
        %2061 = vmatpush1.msra.mxu0 %v2010
        %2062 = vmatprep.subr.mxu0 0.0
        %2063 = vmatpush1.msra.mxu0 %v2009
        %2064 = vmatprep.subr.mxu0 0.0
        %2065 = vmatpush1.msra.mxu0 %v2008
        %2066 = vmatprep.subr.mxu0 0.0
        %2067 = vmatpush1.msra.mxu0 %v2007
        %2068 = vmatprep.subr.mxu0 0.0
        %2069 = vmatpush1.msra.mxu0 %v2006
        %2070 = vmatprep.subr.mxu0 0.0
        %2071 = vmatpush2.msra.mxu0 %v2037
        %2072 = vmatprep.subr.mxu0 0.0
        %2073 = vmatpush2.msra.mxu0 %v2036
        %2074 = vmatprep.subr.mxu0 0.0
        %2075 = vmatpush2.msra.mxu0 %v2035
        %2076 = vmatprep.subr.mxu0 0.0
        %2077 = vmatpush2.msra.mxu0 %v2034
        %2078 = vmatprep.subr.mxu0 0.0
        %2079 = vmatpush2.msra.mxu0 %v2033
        %2080 = vmatprep.subr.mxu0 0.0
        %2081 = vmatpush2.msra.mxu0 %v2032
        %2082 = vmatprep.subr.mxu0 0.0
        %2083 = vmatpush2.msra.mxu0 %v2031
        %2084 = vmatprep.subr.mxu0 0.0
        %2085 = vmatpush2.msra.mxu0 %v2030
        %2086 = vmatprep.subr.mxu0 0.0
        %2087 = vmatpush2.msra.mxu0 %v2029
        %2088 = vmatprep.subr.mxu0 0.0
        %2089 = vmatpush2.msra.mxu0 %v2028
        %2090 = vmatprep.subr.mxu0 0.0
        %2091 = vmatpush2.msra.mxu0 %v2027
        %2092 = vmatprep.subr.mxu0 0.0
        %2093 = vmatpush2.msra.mxu0 %v2026
        %2094 = vmatprep.subr.mxu0 0.0
        %2095 = vmatpush2.msra.mxu0 %v2025
        %2096 = vmatprep.subr.mxu0 0.0
        %2097 = vmatpush2.msra.mxu0 %v2024
        %2098 = vmatprep.subr.mxu0 0.0
        %2099 = vmatpush2.msra.mxu0 %v2023
        %2100 = vmatprep.subr.mxu0 0.0
        %2101 = vmatpush2.msra.mxu0 %v2022
        %2102 = vmatprep.mubr.f32.mxu0 1.0
        %2103 = vmatmul.mubr.f32.gmra.mxu0 1.0
        %v2104 = vpop.f32.mrf.mxu0
        %v2105 = vadd.f32 0.0, %v2104
        %v2106 = vpop.f32.mrf.mxu0
        %2107 = vdwg.mxu0
        %p2108 = scmp.eq.s32.totalorder %s28, 0
        // Predicated region
        $region57: #{tpu_custom_call.1} parent=55 // pred_check
          %p2109 = pneg %p2108
        $region58: #{tpu_custom_call.1} parent=55 // pred_check_branch
          %2111 = sbr.rel (%p2109) target = $region60
        $region59: #{tpu_custom_call.1} parent=55 // pred_region
          %2112 = vst [vmem:[#allocation2] sm:$0xff] 0.0
        $region60: #{tpu_custom_call.1} parent=55 // pred_fallthru
          _
        %v2113 = vld [vmem:[#allocation2] sm:$0xff]
        %v2114 = vadd.f32 %v2113, %v2105
        %2115 = vst [vmem:[#allocation2] sm:$0xff] %v2114
        // Predicated region
        $region61: #{tpu_custom_call.1} parent=55 // pred_check
          %p2116 = pneg %p2108
        $region62: #{tpu_custom_call.1} parent=55 // pred_check_branch
          %2118 = sbr.rel (%p2116) target = $region64
        $region63: #{tpu_custom_call.1} parent=55 // pred_region
          %v2119 = vld [vmem:[#allocation2] sm:$0xff]
          %v2120 = vmul.f32 %v2119, 0.00390625
          %v2121 = vld [vmem:[%s3] sm:$0xff]
          %v2122 = vld [vmem:[%s3 + $0x8] sm:$0xff]
          %v2123 = vld [vmem:[%s3 + $0x10] sm:$0xff]
          %v2124 = vld [vmem:[%s3 + $0x18] sm:$0xff]
          %v2125 = vld [vmem:[%s3 + $0x20] sm:$0xff]
          %v2126 = vld [vmem:[%s3 + $0x28] sm:$0xff]
          %v2127 = vld [vmem:[%s3 + $0x30] sm:$0xff]
          %v2128 = vld [vmem:[%s3 + $0x38] sm:$0xff]
          %v2129 = vld [vmem:[%s3 + $0x40] sm:$0xff]
          %v2130 = vld [vmem:[%s3 + $0x48] sm:$0xff]
          %v2131 = vld [vmem:[%s3 + $0x50] sm:$0xff]
          %v2132 = vld [vmem:[%s3 + $0x58] sm:$0xff]
          %v2133 = vld [vmem:[%s3 + $0x60] sm:$0xff]
          %v2134 = vld [vmem:[%s3 + $0x68] sm:$0xff]
          %v2135 = vld [vmem:[%s3 + $0x70] sm:$0xff]
          %v2136 = vld [vmem:[%s3 + $0x78] sm:$0xff]
          %v2137 = vld [vmem:[%s4] sm:$0x1]
          %v2139 = vlaneseq
          %v2140 = vshrl.u32 %v2139, 7
          %v2141 = vsub.s32 0, %v2140
          %v2142 = vrot.slane %v2137, %v2141
          %2144 = vmatprep.subr.mxu0 0.0
          %2145 = vmatpush1.msra.mxu0 %v2136
          %2146 = vmatprep.subr.mxu0 0.0
          %2147 = vmatpush1.msra.mxu0 %v2135
          %2148 = vmatprep.subr.mxu0 0.0
          %2149 = vmatpush1.msra.mxu0 %v2134
          %2150 = vmatprep.subr.mxu0 0.0
          %2151 = vmatpush1.msra.mxu0 %v2133
          %2152 = vmatprep.subr.mxu0 0.0
          %2153 = vmatpush1.msra.mxu0 %v2132
          %2154 = vmatprep.subr.mxu0 0.0
          %2155 = vmatpush1.msra.mxu0 %v2131
          %2156 = vmatprep.subr.mxu0 0.0
          %2157 = vmatpush1.msra.mxu0 %v2130
          %2158 = vmatprep.subr.mxu0 0.0
          %2159 = vmatpush1.msra.mxu0 %v2129
          %2160 = vmatprep.subr.mxu0 0.0
          %2161 = vmatpush1.msra.mxu0 %v2128
          %2162 = vmatprep.subr.mxu0 0.0
          %2163 = vmatpush1.msra.mxu0 %v2127
          %2164 = vmatprep.subr.mxu0 0.0
          %2165 = vmatpush1.msra.mxu0 %v2126
          %2166 = vmatprep.subr.mxu0 0.0
          %2167 = vmatpush1.msra.mxu0 %v2125
          %2168 = vmatprep.subr.mxu0 0.0
          %2169 = vmatpush1.msra.mxu0 %v2124
          %2170 = vmatprep.subr.mxu0 0.0
          %2171 = vmatpush1.msra.mxu0 %v2123
          %2172 = vmatprep.subr.mxu0 0.0
          %2173 = vmatpush1.msra.mxu0 %v2122
          %2174 = vmatprep.subr.mxu0 0.0
          %2175 = vmatpush1.msra.mxu0 %v2121
          %2176 = vmatprep.subr.mxu0 0.0
          %2177 = vmatpush2.msra.mxu0 0.0
          %2178 = vmatprep.subr.mxu0 0.0
          %2179 = vmatpush2.msra.mxu0 0.0
          %2180 = vmatprep.subr.mxu0 0.0
          %2181 = vmatpush2.msra.mxu0 0.0
          %2182 = vmatprep.subr.mxu0 0.0
          %2183 = vmatpush2.msra.mxu0 0.0
          %2184 = vmatprep.subr.mxu0 0.0
          %2185 = vmatpush2.msra.mxu0 0.0
          %2186 = vmatprep.subr.mxu0 0.0
          %2187 = vmatpush2.msra.mxu0 0.0
          %2188 = vmatprep.subr.mxu0 0.0
          %2189 = vmatpush2.msra.mxu0 0.0
          %2190 = vmatprep.subr.mxu0 0.0
          %2191 = vmatpush2.msra.mxu0 0.0
          %2192 = vmatprep.subr.mxu0 0.0
          %2193 = vmatpush2.msra.mxu0 0.0
          %2194 = vmatprep.subr.mxu0 0.0
          %2195 = vmatpush2.msra.mxu0 0.0
          %2196 = vmatprep.subr.mxu0 0.0
          %2197 = vmatpush2.msra.mxu0 0.0
          %2198 = vmatprep.subr.mxu0 0.0
          %2199 = vmatpush2.msra.mxu0 0.0
          %2200 = vmatprep.subr.mxu0 0.0
          %2201 = vmatpush2.msra.mxu0 0.0
          %2202 = vmatprep.subr.mxu0 0.0
          %2203 = vmatpush2.msra.mxu0 0.0
          %2204 = vmatprep.subr.mxu0 0.0
          %2205 = vmatpush2.msra.mxu0 0.0
          %2206 = vmatprep.subr.mxu0 0.0
          %2207 = vmatpush2.msra.mxu0 0.0
          %2208 = vmatprep.mubr.f32.mxu0 0.0
          %2209 = vmatmul.mubr.f32.gmra.mxu0 %v2120
          %v2210 = vpop.f32.mrf.mxu0
          %v2211 = vadd.f32 %v2142, %v2210
          %v2212 = vpop.f32.mrf.mxu0
          %2213 = vdwg.mxu0
          %v2214 = vmax.f32 %v2211, 0.0
          %v2215 = vld [vmem:[%s5] sm:$0xff]
          %v2216 = vld [vmem:[%s5 + $0x8] sm:$0xff]
          %v2217 = vld [vmem:[%s5 + $0x10] sm:$0xff]
          %v2218 = vld [vmem:[%s5 + $0x18] sm:$0xff]
          %v2219 = vld [vmem:[%s5 + $0x20] sm:$0xff]
          %v2220 = vld [vmem:[%s5 + $0x28] sm:$0xff]
          %v2221 = vld [vmem:[%s5 + $0x30] sm:$0xff]
          %v2222 = vld [vmem:[%s5 + $0x38] sm:$0xff]
          %v2223 = vld [vmem:[%s5 + $0x40] sm:$0xff]
          %v2224 = vld [vmem:[%s5 + $0x48] sm:$0xff]
          %v2225 = vld [vmem:[%s5 + $0x50] sm:$0xff]
          %v2226 = vld [vmem:[%s5 + $0x58] sm:$0xff]
          %v2227 = vld [vmem:[%s5 + $0x60] sm:$0xff]
          %v2228 = vld [vmem:[%s5 + $0x68] sm:$0xff]
          %v2229 = vld [vmem:[%s5 + $0x70] sm:$0xff]
          %v2230 = vld [vmem:[%s5 + $0x78] sm:$0xff]
          %v2231 = vld [vmem:[%s6] sm:$0x1]
          %v2233 = vlaneseq
          %v2234 = vshrl.u32 %v2233, 7
          %v2235 = vsub.s32 0, %v2234
          %v2236 = vrot.slane %v2231, %v2235
          %2238 = vmatprep.subr.mxu0 0.0
          %2239 = vmatpush1.msra.mxu0 %v2230
          %2240 = vmatprep.subr.mxu0 0.0
          %2241 = vmatpush1.msra.mxu0 %v2229
          %2242 = vmatprep.subr.mxu0 0.0
          %2243 = vmatpush1.msra.mxu0 %v2228
          %2244 = vmatprep.subr.mxu0 0.0
          %2245 = vmatpush1.msra.mxu0 %v2227
          %2246 = vmatprep.subr.mxu0 0.0
          %2247 = vmatpush1.msra.mxu0 %v2226
          %2248 = vmatprep.subr.mxu0 0.0
          %2249 = vmatpush1.msra.mxu0 %v2225
          %2250 = vmatprep.subr.mxu0 0.0
          %2251 = vmatpush1.msra.mxu0 %v2224
          %2252 = vmatprep.subr.mxu0 0.0
          %2253 = vmatpush1.msra.mxu0 %v2223
          %2254 = vmatprep.subr.mxu0 0.0
          %2255 = vmatpush1.msra.mxu0 %v2222
          %2256 = vmatprep.subr.mxu0 0.0
          %2257 = vmatpush1.msra.mxu0 %v2221
          %2258 = vmatprep.subr.mxu0 0.0
          %2259 = vmatpush1.msra.mxu0 %v2220
          %2260 = vmatprep.subr.mxu0 0.0
          %2261 = vmatpush1.msra.mxu0 %v2219
          %2262 = vmatprep.subr.mxu0 0.0
          %2263 = vmatpush1.msra.mxu0 %v2218
          %2264 = vmatprep.subr.mxu0 0.0
          %2265 = vmatpush1.msra.mxu0 %v2217
          %2266 = vmatprep.subr.mxu0 0.0
          %2267 = vmatpush1.msra.mxu0 %v2216
          %2268 = vmatprep.subr.mxu0 0.0
          %2269 = vmatpush1.msra.mxu0 %v2215
          %2270 = vmatprep.subr.mxu0 0.0
          %2271 = vmatpush2.msra.mxu0 0.0
          %2272 = vmatprep.subr.mxu0 0.0
          %2273 = vmatpush2.msra.mxu0 0.0
          %2274 = vmatprep.subr.mxu0 0.0
          %2275 = vmatpush2.msra.mxu0 0.0
          %2276 = vmatprep.subr.mxu0 0.0
          %2277 = vmatpush2.msra.mxu0 0.0
          %2278 = vmatprep.subr.mxu0 0.0
          %2279 = vmatpush2.msra.mxu0 0.0
          %2280 = vmatprep.subr.mxu0 0.0
          %2281 = vmatpush2.msra.mxu0 0.0
          %2282 = vmatprep.subr.mxu0 0.0
          %2283 = vmatpush2.msra.mxu0 0.0
          %2284 = vmatprep.subr.mxu0 0.0
          %2285 = vmatpush2.msra.mxu0 0.0
          %2286 = vmatprep.subr.mxu0 0.0
          %2287 = vmatpush2.msra.mxu0 0.0
          %2288 = vmatprep.subr.mxu0 0.0
          %2289 = vmatpush2.msra.mxu0 0.0
          %2290 = vmatprep.subr.mxu0 0.0
          %2291 = vmatpush2.msra.mxu0 0.0
          %2292 = vmatprep.subr.mxu0 0.0
          %2293 = vmatpush2.msra.mxu0 0.0
          %2294 = vmatprep.subr.mxu0 0.0
          %2295 = vmatpush2.msra.mxu0 0.0
          %2296 = vmatprep.subr.mxu0 0.0
          %2297 = vmatpush2.msra.mxu0 0.0
          %2298 = vmatprep.subr.mxu0 0.0
          %2299 = vmatpush2.msra.mxu0 0.0
          %2300 = vmatprep.subr.mxu0 0.0
          %2301 = vmatpush2.msra.mxu0 0.0
          %2302 = vmatprep.mubr.f32.mxu0 0.0
          %2303 = vmatmul.mubr.f32.gmra.mxu0 %v2214
          %v2304 = vpop.f32.mrf.mxu0
          %v2305 = vadd.f32 %v2236, %v2304
          %v2306 = vpop.f32.mrf.mxu0
          %2307 = vdwg.mxu0
          %v2308 = vmax.f32 %v2305, 0.0
          %v2309 = vld [vmem:[%s7] sm:$0xff]
          %v2310 = vld [vmem:[%s7 + $0x8] sm:$0xff]
          %v2311 = vld [vmem:[%s7 + $0x10] sm:$0xff]
          %v2312 = vld [vmem:[%s7 + $0x18] sm:$0xff]
          %v2313 = vld [vmem:[%s7 + $0x20] sm:$0xff]
          %v2314 = vld [vmem:[%s7 + $0x28] sm:$0xff]
          %v2315 = vld [vmem:[%s7 + $0x30] sm:$0xff]
          %v2316 = vld [vmem:[%s7 + $0x38] sm:$0xff]
          %v2317 = vld [vmem:[%s7 + $0x40] sm:$0xff]
          %v2318 = vld [vmem:[%s7 + $0x48] sm:$0xff]
          %v2319 = vld [vmem:[%s7 + $0x50] sm:$0xff]
          %v2320 = vld [vmem:[%s7 + $0x58] sm:$0xff]
          %v2321 = vld [vmem:[%s7 + $0x60] sm:$0xff]
          %v2322 = vld [vmem:[%s7 + $0x68] sm:$0xff]
          %v2323 = vld [vmem:[%s7 + $0x70] sm:$0xff]
          %v2324 = vld [vmem:[%s7 + $0x78] sm:$0xff]
          %v2325 = vld [vmem:[%s8] sm:$0x1]
          %v2327 = vlaneseq
          %v2328 = vshrl.u32 %v2327, 7
          %v2329 = vsub.s32 0, %v2328
          %v2330 = vrot.slane %v2325, %v2329
          %2332 = vmatprep.subr.mxu0 0.0
          %2333 = vmatpush1.msra.mxu0 %v2324
          %2334 = vmatprep.subr.mxu0 0.0
          %2335 = vmatpush1.msra.mxu0 %v2323
          %2336 = vmatprep.subr.mxu0 0.0
          %2337 = vmatpush1.msra.mxu0 %v2322
          %2338 = vmatprep.subr.mxu0 0.0
          %2339 = vmatpush1.msra.mxu0 %v2321
          %2340 = vmatprep.subr.mxu0 0.0
          %2341 = vmatpush1.msra.mxu0 %v2320
          %2342 = vmatprep.subr.mxu0 0.0
          %2343 = vmatpush1.msra.mxu0 %v2319
          %2344 = vmatprep.subr.mxu0 0.0
          %2345 = vmatpush1.msra.mxu0 %v2318
          %2346 = vmatprep.subr.mxu0 0.0
          %2347 = vmatpush1.msra.mxu0 %v2317
          %2348 = vmatprep.subr.mxu0 0.0
          %2349 = vmatpush1.msra.mxu0 %v2316
          %2350 = vmatprep.subr.mxu0 0.0
          %2351 = vmatpush1.msra.mxu0 %v2315
          %2352 = vmatprep.subr.mxu0 0.0
          %2353 = vmatpush1.msra.mxu0 %v2314
          %2354 = vmatprep.subr.mxu0 0.0
          %2355 = vmatpush1.msra.mxu0 %v2313
          %2356 = vmatprep.subr.mxu0 0.0
          %2357 = vmatpush1.msra.mxu0 %v2312
          %2358 = vmatprep.subr.mxu0 0.0
          %2359 = vmatpush1.msra.mxu0 %v2311
          %2360 = vmatprep.subr.mxu0 0.0
          %2361 = vmatpush1.msra.mxu0 %v2310
          %2362 = vmatprep.subr.mxu0 0.0
          %2363 = vmatpush1.msra.mxu0 %v2309
          %2364 = vmatprep.subr.mxu0 0.0
          %2365 = vmatpush2.msra.mxu0 0.0
          %2366 = vmatprep.subr.mxu0 0.0
          %2367 = vmatpush2.msra.mxu0 0.0
          %2368 = vmatprep.subr.mxu0 0.0
          %2369 = vmatpush2.msra.mxu0 0.0
          %2370 = vmatprep.subr.mxu0 0.0
          %2371 = vmatpush2.msra.mxu0 0.0
          %2372 = vmatprep.subr.mxu0 0.0
          %2373 = vmatpush2.msra.mxu0 0.0
          %2374 = vmatprep.subr.mxu0 0.0
          %2375 = vmatpush2.msra.mxu0 0.0
          %2376 = vmatprep.subr.mxu0 0.0
          %2377 = vmatpush2.msra.mxu0 0.0
          %2378 = vmatprep.subr.mxu0 0.0
          %2379 = vmatpush2.msra.mxu0 0.0
          %2380 = vmatprep.subr.mxu0 0.0
          %2381 = vmatpush2.msra.mxu0 0.0
          %2382 = vmatprep.subr.mxu0 0.0
          %2383 = vmatpush2.msra.mxu0 0.0
          %2384 = vmatprep.subr.mxu0 0.0
          %2385 = vmatpush2.msra.mxu0 0.0
          %2386 = vmatprep.subr.mxu0 0.0
          %2387 = vmatpush2.msra.mxu0 0.0
          %2388 = vmatprep.subr.mxu0 0.0
          %2389 = vmatpush2.msra.mxu0 0.0
          %2390 = vmatprep.subr.mxu0 0.0
          %2391 = vmatpush2.msra.mxu0 0.0
          %2392 = vmatprep.subr.mxu0 0.0
          %2393 = vmatpush2.msra.mxu0 0.0
          %2394 = vmatprep.subr.mxu0 0.0
          %2395 = vmatpush2.msra.mxu0 0.0
          %2396 = vmatprep.mubr.f32.mxu0 0.0
          %2397 = vmatmul.mubr.f32.gmra.mxu0 %v2308
          %v2398 = vpop.f32.mrf.mxu0
          %v2399 = vadd.f32 %v2330, %v2398
          %v2400 = vpop.f32.mrf.mxu0
          %2401 = vdwg.mxu0
          %2402 = vst [vmem:[%s337] sm:$0xff] %v2399
        $region64: #{tpu_custom_call.1} parent=55 // pred_fallthru
          _
        %s2403 = sand.u32 %s237, 1
        %s2404 = scalar_lea.sflag [#allocation4], %s2403
        %s2405 = sand.u32 %s237, 1
        %s2406 = smul.addr %s2405, 8
        %s2407 = scalar_lea.vmem [#allocation3], %s2406
        // Predicated region
        $region65: #{tpu_custom_call.1} parent=55 // pred_check
          %p2408 = pneg %p247
        $region66: #{tpu_custom_call.1} parent=55 // pred_check_branch
          %2410 = sbr.rel (%p2408) target = $region68
        $region67: #{tpu_custom_call.1} parent=55 // pred_region
          %s2412 = ssub.s32 128, 128
          %2413 = vsyncadd %s2404, %s2412
          %s2414 = smul.addr %s27, 128
          %s2415 = scalar_lea.hbm %s9, %s2414
          %s2417 = sshll.u32 %s2407, 4
          %s2418 = int_to_ptr.vmem [resolvable:$true] %s2417
          %2420 = dma.vmem_to_hbm [thread:$0]  %s2418, 128, %s2415, %s2404
        $region68: #{tpu_custom_call.1} parent=55 // pred_fallthru
          _
      $region56: #{tpu_custom_call.1} parent=5 // pred_fallthru
        _
      %p2421 = scmp.le.s32.totalorder 2, %s18
      // Predicated region
      $region69: #{tpu_custom_call.1} parent=5 // pred_check
        %p2422 = pneg %p2421
      $region70: #{tpu_custom_call.1} parent=5 // pred_check_branch
        %2424 = sbr.rel (%p2422) target = $region72
      $region71: #{tpu_custom_call.1} parent=5 // pred_region
        %s2425 = ssub.s32 %s18, 2
        // Predicated region
        $region73: #{tpu_custom_call.1} parent=71 // pred_check
          %p2426 = pneg %p253
        $region74: #{tpu_custom_call.1} parent=71 // pred_check_branch
          %2428 = sbr.rel (%p2426) target = $region76
        $region75: #{tpu_custom_call.1} parent=71 // pred_region
          %s2429 = sand.u32 %s238, 1
          %s2430 = scalar_lea.sflag [#allocation4], %s2429
          %s2431 = sand.u32 %s238, 1
          %s2432 = smul.addr %s2431, 8
          %s2433 = scalar_lea.vmem [#allocation3], %s2432
          %2434 = dma.done %s2430, 128
        $region76: #{tpu_custom_call.1} parent=71 // pred_fallthru
          _
      $region72: #{tpu_custom_call.1} parent=5 // pred_fallthru
        _
    $region6: #{tpu_custom_call.1} parent=1 // loop_footer
      %s22 = sadd.s32 1, %s18
    $region7: #{tpu_custom_call.1} parent=1 // loop_footer_branch
      %17 = sbr.rel target = $region3
    $region8: #{tpu_custom_call.1} parent=1 // loop_exit
      _
    %2435 = vsyncpa [#allocation4], 1
    %s2436 = scalar_lea.sflag [#allocation4], 1
    %2437 = vsyncpa %s2436, 1

</llo_original>
